<compile_context>
chip_gen: v7x
topology: tpu7x:2x2x1
jax: 0.10.0
libtpu: 0.0.40
codegen_flags: <defaults>
</compile_context>

<pallas_src>
import math

import jax
import jax.numpy as jnp
from jax.experimental import pallas as pl
from jax.experimental.pallas import tpu as pltpu


# --------------------------------------------------------------------------- kernel
def residual_kernel(x_ref, mask_ref, w1_ref, b1_ref, w2_ref, b2_ref, out_ref, rp2_ref):
    """One batch-block per grid step, flat lane-dense layout.

    x_ref   : (R, W*Cin_p)   bf16  R = B_blk*(H+2); each image = zero halo row, H data
                                   rows, zero halo row (SAME-H pad done in the wrapper)
    mask_ref: (R, 1)         f32   1.0 on interior data rows, 0.0 on halo rows
    w*_ref  : (3, K, W*Cout) bf16  per-dy banded weights (dx taps + SAME-W pad + BN scale)
    b*_ref  : (1, W*Cout)    f32   BN shift + conv bias, tiled along w
    out_ref : (R, W*Cout)    f32   rows m with (m mod (H+2)) < H carry the real outputs
    rp2_ref : (R, W*Cout)    f32   conv2 input staging buffer (same padded layout as x)
    """
    R = x_ref.shape[0]
    M = R - 2                       # rows produced by one banded 3-tap conv
    wcout = out_ref.shape[1]

    # ---- conv1: 3 deep MXU matmuls over the flat padded slab (bf16 in, f32 acc) -------
    x = x_ref[...]
    acc = jnp.dot(x[0:M], w1_ref[0], preferred_element_type=jnp.float32)
    acc += jnp.dot(x[1:M + 1], w1_ref[1], preferred_element_type=jnp.float32)
    acc += jnp.dot(x[2:M + 2], w1_ref[2], preferred_element_type=jnp.float32)
    y = acc + b1_ref[...]                                  # fused BN(eval) + conv bias
    y = jnp.where(y >= 0, y, 0.1 * y)                      # leaky_relu(0.1)
    # Rows straddling an image boundary are junk; zero them so that, shifted by one row
    # into rp2's padded layout, they become conv2's SAME-H halo rows.
    y = y * mask_ref[1:R - 1, :]

    # ---- stage conv2 input in padded layout --------------------------------------------
    rp2_ref[0:1, :] = jnp.zeros((1, wcout), jnp.float32)       # first image's top halo
    rp2_ref[R - 1:R, :] = jnp.zeros((1, wcout), jnp.float32)   # last image's bottom halo
    rp2_ref[1:R - 1, :] = y

    # ---- conv2 --------------------------------------------------------------------------
    rp2 = rp2_ref[...].astype(jnp.bfloat16)
    acc2 = jnp.dot(rp2[0:M], w2_ref[0], preferred_element_type=jnp.float32)
    acc2 += jnp.dot(rp2[1:M + 1], w2_ref[1], preferred_element_type=jnp.float32)
    acc2 += jnp.dot(rp2[2:M + 2], w2_ref[2], preferred_element_type=jnp.float32)
    z = acc2 + b2_ref[...]
    z = jnp.where(z >= 0, z, 0.1 * z)

    out_ref[0:M, :] = z                                        # lane-dense (128) store
    out_ref[M:R, :] = jnp.zeros((2, wcout), jnp.float32)       # tail junk rows


# --------------------------------------------------------------------------- wrapper
def _choose_batch_block(n, padded_rows, target=16):
    """Largest B_blk <= target dividing n with (B_blk*padded_rows) % 8 == 0 and a grid of
    >= 2 steps (so v7x's two TensorCores both get work).  Falls back to a single block
    covering the whole batch (block shape == full array => always layout-legal)."""
    best = None
    for b in range(1, min(target, n) + 1):
        if n % b == 0 and (b * padded_rows) % 8 == 0 and n // b >= 2:
            best = b
    return best if best is not None else n


def residual_forward(x_nchw, w1b, b1v, w2b, b2v, *, batch_block=16):
    """x_nchw: (N, Cin, H, W) f32.  w*b: (3, K, W*Cout) bf16 banded weights (BN scale
    folded, Cin possibly zero-padded).  b*v: (1, W*Cout) f32 shifts.
    Returns (N, Cout, H, W) f32."""
    N, Cin, H, W = x_nchw.shape
    wcin_p = w1b.shape[1]
    cin_p = wcin_p // W
    wcout = w1b.shape[2]
    cout = wcout // W
    rows = H + 2

    bblk = _choose_batch_block(N, rows, batch_block)
    R = bblk * rows

    # One-time layout prep (plain JAX, fused by XLA): NCHW -> NHWC, zero-pad channels to
    # cin_p (lane-dense), zero-pad H by 1 on both sides (SAME-H halo), flatten to a
    # lane-dense (N*(H+2), W*cin_p) bf16 slab.
    x = jnp.transpose(x_nchw, (0, 2, 3, 1))
    x = jnp.pad(x, ((0, 0), (1, 1), (0, 0), (0, cin_p - Cin)))
    x_flat = x.reshape(N * rows, wcin_p).astype(jnp.bfloat16)

    # Per-block row-validity mask: 1.0 on interior data rows (p in [1, H]), 0.0 on halos.
    p = jnp.arange(R, dtype=jnp.int32) % rows
    mask = ((p >= 1) & (p <= H)).astype(jnp.float32).reshape(R, 1)

    out_flat = pl.pallas_call(
        residual_kernel,
        out_shape=jax.ShapeDtypeStruct((N * rows, wcout), jnp.float32),
        grid=(N // bblk,),
        in_specs=[
            pl.BlockSpec((R, wcin_p), lambda n: (n, 0)),
            pl.BlockSpec((R, 1), lambda n: (0, 0)),
            pl.BlockSpec((3, wcin_p, wcout), lambda n: (0, 0, 0)),
            pl.BlockSpec((1, wcout), lambda n: (0, 0)),
            pl.BlockSpec((3, wcout, wcout), lambda n: (0, 0, 0)),
            pl.BlockSpec((1, wcout), lambda n: (0, 0)),
        ],
        out_specs=pl.BlockSpec((R, wcout), lambda n: (n, 0)),
        scratch_shapes=[pltpu.VMEM((R, wcout), jnp.float32)],   # conv2 staging buffer
        compiler_params=pltpu.CompilerParams(
            dimension_semantics=("parallel",),      # v7x: shard batch blocks over 2 TCs
            vmem_limit_bytes=32 * 1024 * 1024,      # generous; per-step footprint ~2 MiB
        ),
    )(x_flat, mask, w1b, b1v, w2b, b2v)

    out = out_flat.reshape(N, rows, W, cout)[:, :H]   # drop halo / image-boundary junk rows
    return jnp.transpose(out, (0, 3, 1, 2))


# --------------------------------------------------------------------------- param folding
def _fold_bn(conv_bias, gamma, beta, rmean, rvar, eps=1e-5):
    scale = gamma / jnp.sqrt(rvar + eps)
    shift = scale * (conv_bias - rmean) + beta
    return scale, shift


def _band_weights(w_oihw, W):
    """OIHW 3x3 conv weight -> (3, W*Cin, W*Cout) banded matrices.

    band[dy, win*Cin+ci, wout*Cout+co] = w[co, ci, dy, win-wout+1] inside the 3-tap band,
    0 outside: dx taps and SAME padding along W fold into a block-banded matmul over the
    flattened (w, c) lane axis."""
    Cout, Cin, kh, kw = w_oihw.shape
    w = jnp.transpose(w_oihw, (2, 3, 1, 0))                 # (kh, kw, Cin, Cout)
    win = jnp.arange(W)[:, None]
    wout = jnp.arange(W)[None, :]
    dx = win - wout + (kw // 2)                             # (W, W) tap index
    valid = (dx >= 0) & (dx < kw)
    taps = w[:, jnp.clip(dx, 0, kw - 1)]                    # (kh, W, W, Cin, Cout)
    taps = jnp.where(valid[None, :, :, None, None], taps, 0.0)
    return taps.transpose(0, 1, 3, 2, 4).reshape(kh, W * Cin, W * Cout)


def prepare_params(w1_oihw, b1c, g1, be1, m1, v1,
                   w2_oihw, b2c, g2, be2, m2, v2, W, eps=1e-5):
    """Fold conv bias + eval-mode BN into banded bf16 weights and f32 shifts; pad Cin so
    the conv1 lane axis (W*Cin) is a multiple of 128 (lane-dense LHS)."""
    s1, sh1 = _fold_bn(b1c, g1, be1, m1, v1, eps)
    s2, sh2 = _fold_bn(b2c, g2, be2, m2, v2, eps)
    cout, cin = w1_oihw.shape[0], w1_oihw.shape[1]
    lane_q = 128 // math.gcd(128, W)
    cin_p = ((cin + lane_q - 1) // lane_q) * lane_q
    w1p = jnp.pad(w1_oihw, ((0, 0), (0, cin_p - cin), (0, 0), (0, 0)))
    w1b = (_band_weights(w1p, W) * jnp.tile(s1, W)[None, None, :]).astype(jnp.bfloat16)
    w2b = (_band_weights(w2_oihw, W) * jnp.tile(s2, W)[None, None, :]).astype(jnp.bfloat16)
    b1v = jnp.tile(sh1, W).reshape(1, W * cout).astype(jnp.float32)
    b2v = jnp.tile(sh2, W).reshape(1, W * cout).astype(jnp.float32)
    return w1b, b1v, w2b, b2v


# --------------------------------------------------------------------------- references
def _ref_forward(x, w1_oihw, b1c, g1, be1, m1, v1,
                 w2_oihw, b2c, g2, be2, m2, v2, eps=1e-5):
    """Exact f32 semantics of the PyTorch module (eval-mode BN)."""
    hp = jax.lax.Precision.HIGHEST

    def block(x, w, bc, g, be, m, v):
        y = jax.lax.conv_general_dilated(
            x, w, (1, 1), ((1, 1), (1, 1)),
            dimension_numbers=("NCHW", "OIHW", "NCHW"), precision=hp)
        y = y + bc.reshape(1, -1, 1, 1)
        y = g.reshape(1, -1, 1, 1) * (y - m.reshape(1, -1, 1, 1)) / jnp.sqrt(
            v.reshape(1, -1, 1, 1) + eps) + be.reshape(1, -1, 1, 1)
        return jnp.where(y >= 0, y, 0.1 * y)

    x = block(x, w1_oihw, b1c, g1, be1, m1, v1)
    x = block(x, w2_oihw, b2c, g2, be2, m2, v2)
    return x


def _ref_forward_bf16(x, w1_oihw, b1c, g1, be1, m1, v1,
                      w2_oihw, b2c, g2, be2, m2, v2, eps=1e-5):
    """Reference emulating the kernel's numerics (BN scale folded into the weight, operands
    rounded to bf16, f32 accumulation) — tight structural check."""
    hp = jax.lax.Precision.HIGHEST

    def rb(a):  # round through bf16
        return a.astype(jnp.bfloat16).astype(jnp.float32)

    def block(x, w_oihw, bc, g, be, m, v):
        s, sh = _fold_bn(bc, g, be, m, v, eps)
        y = jax.lax.conv_general_dilated(
            rb(x), rb(w_oihw * s.reshape(-1, 1, 1, 1)), (1, 1), ((1, 1), (1, 1)),
            dimension_numbers=("NCHW", "OIHW", "NCHW"), precision=hp)
        y = y + sh.reshape(1, -1, 1, 1)
        return jnp.where(y >= 0, y, 0.1 * y)

    x = block(x, w1_oihw, b1c, g1, be1, m1, v1)
    x = block(x, w2_oihw, b2c, g2, be2, m2, v2)
    return x


if __name__ == "__main__":
    key = jax.random.PRNGKey(0)
    ks = jax.random.split(key, 14)
    Cin, Cout, H, W = 4, 8, 16, 16          # W*Cout = 128 -> lane-dense output

    # conv1 / bn1 parameters (PyTorch shapes), deterministic
    w1_oihw = 0.1 * jax.random.normal(ks[1], (Cout, Cin, 3, 3), jnp.float32)
    b1c = 0.05 * jax.random.normal(ks[2], (Cout,), jnp.float32)
    g1 = 1.0 + 0.1 * jax.random.normal(ks[3], (Cout,), jnp.float32)
    be1 = 0.1 * jax.random.normal(ks[4], (Cout,), jnp.float32)
    m1 = 0.1 * jax.random.normal(ks[5], (Cout,), jnp.float32)
    v1 = 0.5 + jnp.abs(jax.random.normal(ks[6], (Cout,), jnp.float32)) * 0.5

    # conv2 / bn2 parameters
    w2_oihw = 0.1 * jax.random.normal(ks[7], (Cout, Cout, 3, 3), jnp.float32)
    b2c = 0.05 * jax.random.normal(ks[8], (Cout,), jnp.float32)
    g2 = 1.0 + 0.1 * jax.random.normal(ks[9], (Cout,), jnp.float32)
    be2 = 0.1 * jax.random.normal(ks[10], (Cout,), jnp.float32)
    m2 = 0.1 * jax.random.normal(ks[11], (Cout,), jnp.float32)
    v2 = 0.5 + jnp.abs(jax.random.normal(ks[12], (Cout,), jnp.float32)) * 0.5

    # one-time parameter folding (outside the per-call hot path)
    w1b, b1v, w2b, b2v = prepare_params(w1_oihw, b1c, g1, be1, m1, v1,
                                        w2_oihw, b2c, g2, be2, m2, v2, W)
    fwd = jax.jit(residual_forward)

    # N=32 exercises the batch-blocked fast path (B_blk=16, M=286 rows/matmul, grid=2 ->
    # both v7x TensorCores); N=2 exercises the small-batch single-block fallback.
    for N in (32, 2):
        x = jax.random.normal(ks[0], (N, Cin, H, W), jnp.float32)
        out = jax.block_until_ready(fwd(x, w1b, b1v, w2b, b2v))
        assert out.shape == (N, Cout, H, W), out.shape

        # Tight check vs a reference emulating the kernel's bf16-operand / f32-accumulate
        # numerics: catches any structural (tap / fold / layout / halo) bug.
        ref_bf16 = _ref_forward_bf16(x, w1_oihw, b1c, g1, be1, m1, v1,
                                     w2_oihw, b2c, g2, be2, m2, v2)
        assert jnp.allclose(out, ref_bf16, atol=5e-3, rtol=5e-3), \
            float(jnp.max(jnp.abs(out - ref_bf16)))

        # Loose check vs exact f32 module semantics (bf16 MXU inputs trade a little
        # precision for far fewer MXU passes).
        ref = _ref_forward(x, w1_oihw, b1c, g1, be1, m1, v1,
                           w2_oihw, b2c, g2, be2, m2, v2)
        assert jnp.allclose(out, ref, atol=5e-2, rtol=5e-2), \
            float(jnp.max(jnp.abs(out - ref)))

    print("KERNEL_OK")
</pallas_src>

<mosaic_0001>
module attributes {stable_mosaic.version = 11 : i64} {
  func.func @residual_kernel(%arg0: i32, %arg1: memref<288x128xbf16, #tpu.memory_space<vmem>>, %arg2: memref<288x1xf32, #tpu.memory_space<vmem>>, %arg3: memref<3x128x128xbf16, #tpu.memory_space<vmem>>, %arg4: memref<1x128xf32, #tpu.memory_space<vmem>>, %arg5: memref<3x128x128xbf16, #tpu.memory_space<vmem>>, %arg6: memref<1x128xf32, #tpu.memory_space<vmem>>, %arg7: memref<288x128xf32, #tpu.memory_space<vmem>>, %arg8: memref<288x128xf32, #tpu.memory_space<vmem>>) attributes {dimension_semantics = [#tpu.dimension_semantics<parallel>], iteration_bounds = array<i64: 2>, scalar_prefetch = 0 : i64, scratch_operands = 1 : i64, tpu.core_type = #tpu.core_type<tc>, window_params = [{transform_indices = @transform_0, window_bounds = array<i64: 288, 128>}, {pipeline_mode = #tpu.pipeline_mode<synchronous>, transform_indices = @transform_1, window_bounds = array<i64: 288, 1>}, {pipeline_mode = #tpu.pipeline_mode<synchronous>, transform_indices = @transform_2, window_bounds = array<i64: 3, 128, 128>}, {pipeline_mode = #tpu.pipeline_mode<synchronous>, transform_indices = @transform_3, window_bounds = array<i64: 1, 128>}, {pipeline_mode = #tpu.pipeline_mode<synchronous>, transform_indices = @transform_4, window_bounds = array<i64: 3, 128, 128>}, {pipeline_mode = #tpu.pipeline_mode<synchronous>, transform_indices = @transform_5, window_bounds = array<i64: 1, 128>}, {transform_indices = @transform_6, window_bounds = array<i64: 288, 128>}]} {
    %c0 = arith.constant 0 : index
    %c0_0 = arith.constant 0 : index
    %0 = vector.load %arg1[%c0, %c0_0] : memref<288x128xbf16, #tpu.memory_space<vmem>>, vector<288x128xbf16>
    %1 = vector.extract_strided_slice %0 {offsets = [0, 0], sizes = [286, 128], strides = [1, 1]} : vector<288x128xbf16> to vector<286x128xbf16>
    %c0_1 = arith.constant 0 : index
    %c0_2 = arith.constant 0 : index
    %c0_3 = arith.constant 0 : index
    %2 = vector.load %arg3[%c0_1, %c0_2, %c0_3] : memref<3x128x128xbf16, #tpu.memory_space<vmem>>, vector<1x128x128xbf16>
    %3 = vector.shape_cast %2 : vector<1x128x128xbf16> to vector<128x128xbf16>
    %cst = arith.constant dense<0.000000e+00> : vector<286x128xf32>
    %4 = tpu.matmul %1, %3, %cst {dimension_numbers = #tpu.dot_dimension_numbers<[1], [0], [0], [1], [0, 0, 1, 1], [], []>} : vector<286x128xbf16>, vector<128x128xbf16>, vector<286x128xf32> -> vector<286x128xf32>
    %5 = vector.extract_strided_slice %0 {offsets = [1, 0], sizes = [286, 128], strides = [1, 1]} : vector<288x128xbf16> to vector<286x128xbf16>
    %c1 = arith.constant 1 : index
    %c0_4 = arith.constant 0 : index
    %c0_5 = arith.constant 0 : index
    %6 = vector.load %arg3[%c1, %c0_4, %c0_5] : memref<3x128x128xbf16, #tpu.memory_space<vmem>>, vector<1x128x128xbf16>
    %7 = vector.shape_cast %6 : vector<1x128x128xbf16> to vector<128x128xbf16>
    %cst_6 = arith.constant dense<0.000000e+00> : vector<286x128xf32>
    %8 = tpu.matmul %5, %7, %cst_6 {dimension_numbers = #tpu.dot_dimension_numbers<[1], [0], [0], [1], [0, 0, 1, 1], [], []>} : vector<286x128xbf16>, vector<128x128xbf16>, vector<286x128xf32> -> vector<286x128xf32>
    %9 = arith.addf %4, %8 : vector<286x128xf32>
    %10 = vector.extract_strided_slice %0 {offsets = [2, 0], sizes = [286, 128], strides = [1, 1]} : vector<288x128xbf16> to vector<286x128xbf16>
    %c2 = arith.constant 2 : index
    %c0_7 = arith.constant 0 : index
    %c0_8 = arith.constant 0 : index
    %11 = vector.load %arg3[%c2, %c0_7, %c0_8] : memref<3x128x128xbf16, #tpu.memory_space<vmem>>, vector<1x128x128xbf16>
    %12 = vector.shape_cast %11 : vector<1x128x128xbf16> to vector<128x128xbf16>
    %cst_9 = arith.constant dense<0.000000e+00> : vector<286x128xf32>
    %13 = tpu.matmul %10, %12, %cst_9 {dimension_numbers = #tpu.dot_dimension_numbers<[1], [0], [0], [1], [0, 0, 1, 1], [], []>} : vector<286x128xbf16>, vector<128x128xbf16>, vector<286x128xf32> -> vector<286x128xf32>
    %14 = arith.addf %9, %13 : vector<286x128xf32>
    %c0_10 = arith.constant 0 : index
    %c0_11 = arith.constant 0 : index
    %15 = vector.load %arg4[%c0_10, %c0_11] : memref<1x128xf32, #tpu.memory_space<vmem>>, vector<1x128xf32>
    %16 = vector.broadcast %15 : vector<1x128xf32> to vector<286x128xf32>
    %17 = arith.addf %14, %16 : vector<286x128xf32>
    %cst_12 = arith.constant 0.000000e+00 : f32
    %18 = vector.broadcast %cst_12 : f32 to vector<286x128xf32>
    %19 = arith.cmpf oge, %17, %18 : vector<286x128xf32>
    %cst_13 = arith.constant 1.000000e-01 : f32
    %20 = vector.broadcast %cst_13 : f32 to vector<286x128xf32>
    %21 = arith.mulf %20, %17 : vector<286x128xf32>
    %22 = arith.select %19, %17, %21 : vector<286x128xi1>, vector<286x128xf32>
    %c1_14 = arith.constant 1 : index
    %c0_15 = arith.constant 0 : index
    %23 = vector.load %arg2[%c1_14, %c0_15] : memref<288x1xf32, #tpu.memory_space<vmem>>, vector<286x1xf32>
    %24 = vector.broadcast %23 : vector<286x1xf32> to vector<286x128xf32>
    %25 = arith.mulf %22, %24 : vector<286x128xf32>
    %cst_16 = arith.constant 0.000000e+00 : f32
    %26 = vector.broadcast %cst_16 : f32 to vector<1x128xf32>
    %c0_17 = arith.constant 0 : index
    %c0_18 = arith.constant 0 : index
    %27 = vector.load %arg8[%c0_17, %c0_18] : memref<288x128xf32, #tpu.memory_space<vmem>>, vector<1x128xf32>
    tpu.vector_store %arg8[%c0_17, %c0_18], %26 {strides = array<i32>} : memref<288x128xf32, #tpu.memory_space<vmem>>, vector<1x128xf32>,
    %cst_19 = arith.constant 0.000000e+00 : f32
    %28 = vector.broadcast %cst_19 : f32 to vector<1x128xf32>
    %c287 = arith.constant 287 : index
    %c0_20 = arith.constant 0 : index
    %29 = vector.load %arg8[%c287, %c0_20] : memref<288x128xf32, #tpu.memory_space<vmem>>, vector<1x128xf32>
    tpu.vector_store %arg8[%c287, %c0_20], %28 {strides = array<i32>} : memref<288x128xf32, #tpu.memory_space<vmem>>, vector<1x128xf32>,
    %c1_21 = arith.constant 1 : index
    %c0_22 = arith.constant 0 : index
    %30 = vector.load %arg8[%c1_21, %c0_22] : memref<288x128xf32, #tpu.memory_space<vmem>>, vector<286x128xf32>
    tpu.vector_store %arg8[%c1_21, %c0_22], %25 {strides = array<i32>} : memref<288x128xf32, #tpu.memory_space<vmem>>, vector<286x128xf32>,
    %c0_23 = arith.constant 0 : index
    %c0_24 = arith.constant 0 : index
    %31 = vector.load %arg8[%c0_23, %c0_24] : memref<288x128xf32, #tpu.memory_space<vmem>>, vector<288x128xf32>
    %32 = arith.truncf %31 : vector<288x128xf32> to vector<288x128xbf16>
    %33 = vector.extract_strided_slice %32 {offsets = [0, 0], sizes = [286, 128], strides = [1, 1]} : vector<288x128xbf16> to vector<286x128xbf16>
    %c0_25 = arith.constant 0 : index
    %c0_26 = arith.constant 0 : index
    %c0_27 = arith.constant 0 : index
    %34 = vector.load %arg5[%c0_25, %c0_26, %c0_27] : memref<3x128x128xbf16, #tpu.memory_space<vmem>>, vector<1x128x128xbf16>
    %35 = vector.shape_cast %34 : vector<1x128x128xbf16> to vector<128x128xbf16>
    %cst_28 = arith.constant dense<0.000000e+00> : vector<286x128xf32>
    %36 = tpu.matmul %33, %35, %cst_28 {dimension_numbers = #tpu.dot_dimension_numbers<[1], [0], [0], [1], [0, 0, 1, 1], [], []>} : vector<286x128xbf16>, vector<128x128xbf16>, vector<286x128xf32> -> vector<286x128xf32>
    %37 = vector.extract_strided_slice %32 {offsets = [1, 0], sizes = [286, 128], strides = [1, 1]} : vector<288x128xbf16> to vector<286x128xbf16>
    %c1_29 = arith.constant 1 : index
    %c0_30 = arith.constant 0 : index
    %c0_31 = arith.constant 0 : index
    %38 = vector.load %arg5[%c1_29, %c0_30, %c0_31] : memref<3x128x128xbf16, #tpu.memory_space<vmem>>, vector<1x128x128xbf16>
    %39 = vector.shape_cast %38 : vector<1x128x128xbf16> to vector<128x128xbf16>
    %cst_32 = arith.constant dense<0.000000e+00> : vector<286x128xf32>
    %40 = tpu.matmul %37, %39, %cst_32 {dimension_numbers = #tpu.dot_dimension_numbers<[1], [0], [0], [1], [0, 0, 1, 1], [], []>} : vector<286x128xbf16>, vector<128x128xbf16>, vector<286x128xf32> -> vector<286x128xf32>
    %41 = arith.addf %36, %40 : vector<286x128xf32>
    %42 = vector.extract_strided_slice %32 {offsets = [2, 0], sizes = [286, 128], strides = [1, 1]} : vector<288x128xbf16> to vector<286x128xbf16>
    %c2_33 = arith.constant 2 : index
    %c0_34 = arith.constant 0 : index
    %c0_35 = arith.constant 0 : index
    %43 = vector.load %arg5[%c2_33, %c0_34, %c0_35] : memref<3x128x128xbf16, #tpu.memory_space<vmem>>, vector<1x128x128xbf16>
    %44 = vector.shape_cast %43 : vector<1x128x128xbf16> to vector<128x128xbf16>
    %cst_36 = arith.constant dense<0.000000e+00> : vector<286x128xf32>
    %45 = tpu.matmul %42, %44, %cst_36 {dimension_numbers = #tpu.dot_dimension_numbers<[1], [0], [0], [1], [0, 0, 1, 1], [], []>} : vector<286x128xbf16>, vector<128x128xbf16>, vector<286x128xf32> -> vector<286x128xf32>
    %46 = arith.addf %41, %45 : vector<286x128xf32>
    %c0_37 = arith.constant 0 : index
    %c0_38 = arith.constant 0 : index
    %47 = vector.load %arg6[%c0_37, %c0_38] : memref<1x128xf32, #tpu.memory_space<vmem>>, vector<1x128xf32>
    %48 = vector.broadcast %47 : vector<1x128xf32> to vector<286x128xf32>
    %49 = arith.addf %46, %48 : vector<286x128xf32>
    %cst_39 = arith.constant 0.000000e+00 : f32
    %50 = vector.broadcast %cst_39 : f32 to vector<286x128xf32>
    %51 = arith.cmpf oge, %49, %50 : vector<286x128xf32>
    %cst_40 = arith.constant 1.000000e-01 : f32
    %52 = vector.broadcast %cst_40 : f32 to vector<286x128xf32>
    %53 = arith.mulf %52, %49 : vector<286x128xf32>
    %54 = arith.select %51, %49, %53 : vector<286x128xi1>, vector<286x128xf32>
    %c0_41 = arith.constant 0 : index
    %c0_42 = arith.constant 0 : index
    %55 = vector.load %arg7[%c0_41, %c0_42] : memref<288x128xf32, #tpu.memory_space<vmem>>, vector<286x128xf32>
    tpu.vector_store %arg7[%c0_41, %c0_42], %54 {strides = array<i32>} : memref<288x128xf32, #tpu.memory_space<vmem>>, vector<286x128xf32>,
    %cst_43 = arith.constant 0.000000e+00 : f32
    %56 = vector.broadcast %cst_43 : f32 to vector<2x128xf32>
    %c286 = arith.constant 286 : index
    %c0_44 = arith.constant 0 : index
    %57 = vector.load %arg7[%c286, %c0_44] : memref<288x128xf32, #tpu.memory_space<vmem>>, vector<2x128xf32>
    tpu.vector_store %arg7[%c286, %c0_44], %56 {strides = array<i32>} : memref<288x128xf32, #tpu.memory_space<vmem>>, vector<2x128xf32>,
    return
  }
  func.func @transform_0(%arg0: i32) -> (i32, i32) {
    %c0_i32 = arith.constant 0 : i32
    %c0_i32_0 = arith.constant 0 : i32
    return %arg0, %c0_i32 : i32, i32
  }
  func.func @transform_1(%arg0: i32) -> (i32, i32) {
    %c0_i32 = arith.constant 0 : i32
    %c0_i32_0 = arith.constant 0 : i32
    %c0_i32_1 = arith.constant 0 : i32
    return %c0_i32, %c0_i32_0 : i32, i32
  }
  func.func @transform_2(%arg0: i32) -> (i32, i32, i32) {
    %c0_i32 = arith.constant 0 : i32
    %c0_i32_0 = arith.constant 0 : i32
    %c0_i32_1 = arith.constant 0 : i32
    %c0_i32_2 = arith.constant 0 : i32
    return %c0_i32, %c0_i32_0, %c0_i32_1 : i32, i32, i32
  }
  func.func @transform_3(%arg0: i32) -> (i32, i32) {
    %c0_i32 = arith.constant 0 : i32
    %c0_i32_0 = arith.constant 0 : i32
    %c0_i32_1 = arith.constant 0 : i32
    return %c0_i32, %c0_i32_0 : i32, i32
  }
  func.func @transform_4(%arg0: i32) -> (i32, i32, i32) {
    %c0_i32 = arith.constant 0 : i32
    %c0_i32_0 = arith.constant 0 : i32
    %c0_i32_1 = arith.constant 0 : i32
    %c0_i32_2 = arith.constant 0 : i32
    return %c0_i32, %c0_i32_0, %c0_i32_1 : i32, i32, i32
  }
  func.func @transform_5(%arg0: i32) -> (i32, i32) {
    %c0_i32 = arith.constant 0 : i32
    %c0_i32_0 = arith.constant 0 : i32
    %c0_i32_1 = arith.constant 0 : i32
    return %c0_i32, %c0_i32_0 : i32, i32
  }
  func.func @transform_6(%arg0: i32) -> (i32, i32) {
    %c0_i32 = arith.constant 0 : i32
    %c0_i32_0 = arith.constant 0 : i32
    return %arg0, %c0_i32 : i32, i32
  }
}

</mosaic_0001>

<llo_original>
// kernel: residual_forward.1
$region0: #{residual_forward.1}
  #allocation0 [shape = 'u32[]', space=smem, size = 0x4, offset = 0x4, fixed_abs, tag = 'smem constant byte address 0x4 - core index']
  #allocation1 [shape = 'u32[144,128]{1,0:T(1,128)}', space=vmem, size = 0x12000, scoped, tag = 'internal scratch']
  #allocation2 [shape = 'f32[288,128]{1,0:T(8,128)}', space=vmem, size = 0x24000, scoped, tag = 'scratch operand']
  %s0 = inlined_call_operand.vmem [shape: bf16[576,128], index: 0, kind: input, shape index: {}]
  %s1 = inlined_call_operand.vmem [shape: f32[288,1], index: 1, kind: input, shape index: {}]
  %s2 = inlined_call_operand.vmem [shape: bf16[3,128,128], index: 2, kind: input, shape index: {}]
  %s3 = inlined_call_operand.vmem [shape: f32[1,128], index: 3, kind: input, shape index: {}]
  %s4 = inlined_call_operand.vmem [shape: bf16[3,128,128], index: 4, kind: input, shape index: {}]
  %s5 = inlined_call_operand.vmem [shape: f32[1,128], index: 5, kind: input, shape index: {}]
  %s6 = inlined_call_operand.vmem [shape: f32[576,128], index: 6, kind: output, shape index: {}]
  %s7 = sld [smem:[#allocation0]]
  $region57: #{residual_forward.1} parent=0
    _
  %s9 = ssub.s32 1, %s7
  %s10 = scalar_select 0, %s9, %s7
  loop: start=0, step=1, limit=4
  $region2: #{residual_forward.1} parent=0 // loop_pre_header
    _
  $region3: #{residual_forward.1} parent=0 // loop_header
    %s12 = sphi 0, %s16
    %p13 = scmp.ge.s32.totalorder %s12, 4
    %s22 = sphi 0, %s24
    %s25 = sphi 0, %s22
    %s26 = sphi 0, %s25
    %s42 = sphi 0, %s26
    %s46 = sphi 0, %s46
    %s48 = sphi 0, %s46
    %s49 = sphi 0, %s48
    %s63 = sphi 0, %s49
    %s67 = sphi 0, %s67
    %s69 = sphi 0, %s67
    %s70 = sphi 0, %s69
    %s84 = sphi 0, %s70
    %s88 = sphi 0, %s88
    %s90 = sphi 0, %s88
    %s91 = sphi 0, %s90
    %s105 = sphi 0, %s91
    %s109 = sphi 0, %s109
    %s111 = sphi 0, %s109
    %s112 = sphi 0, %s111
    %s126 = sphi 0, %s112
    %s130 = sphi 0, %s130
    %s132 = sphi 0, %s130
    %s133 = sphi 0, %s132
    %s147 = sphi 0, %s133
    %s153 = sphi 0, %s155
    %s156 = sphi 0, %s153
    %s157 = sphi 0, %s156
    %s173 = sphi 0, %s157
  $region4: #{residual_forward.1} parent=0 // loop_header_branch
    %15 = sbr.rel (%p13) target = $region8
  $region5: #{residual_forward.1} parent=0 // loop_body
    %s17 = ssub.s32 %s12, 1
    %s18 = ssub.s32 %s12, 2
    %s19 = sadd.s32 %s12, 1
    %s20 = ssub.s32 %s12, %s19
    %p21 = scmp.eq.s32.totalorder %s20, 0
    %s23 = sadd.s32 %s22, 1
    %s24 = scalar_select %p21, %s22, %s23
    %p27 = pneg %p21
    %p28 = scmp.eq.s32.totalorder %s12, 1
    %p29 = por %p27, %p28
    %p30 = scmp.ne.s32.totalorder %s22, %s25
    %p31 = scmp.eq.s32.totalorder %s12, 0
    %p32 = por %p30, %p31
    %p33 = scmp.ne.s32.totalorder %s22, %s25
    %p34 = scmp.eq.s32.totalorder %s17, 1
    %p35 = por %p33, %p34
    %p36 = scmp.ne.s32.totalorder %s25, %s26
    %p37 = scmp.eq.s32.totalorder %s17, 0
    %p38 = por %p36, %p37
    %p39 = scmp.ne.s32.totalorder %s25, %s26
    %p40 = scmp.eq.s32.totalorder %s18, 1
    %p41 = por %p39, %p40
    %p43 = scmp.ne.s32.totalorder %s26, %s42
    %p44 = scmp.eq.s32.totalorder %s18, 0
    %p45 = por %p43, %p44
    %s47 = sadd.s32 %s46, 1
    %p50 = scmp.eq.s32.totalorder %s12, 1
    %p51 = scmp.ne.s32.totalorder %s46, %s48
    %p52 = scmp.eq.s32.totalorder %s12, 0
    %p53 = por %p51, %p52
    %p54 = scmp.ne.s32.totalorder %s46, %s48
    %p55 = scmp.eq.s32.totalorder %s17, 1
    %p56 = por %p54, %p55
    %p57 = scmp.ne.s32.totalorder %s48, %s49
    %p58 = scmp.eq.s32.totalorder %s17, 0
    %p59 = por %p57, %p58
    %p60 = scmp.ne.s32.totalorder %s48, %s49
    %p61 = scmp.eq.s32.totalorder %s18, 1
    %p62 = por %p60, %p61
    %p64 = scmp.ne.s32.totalorder %s49, %s63
    %p65 = scmp.eq.s32.totalorder %s18, 0
    %p66 = por %p64, %p65
    %s68 = sadd.s32 %s67, 1
    %p71 = scmp.eq.s32.totalorder %s12, 1
    %p72 = scmp.ne.s32.totalorder %s67, %s69
    %p73 = scmp.eq.s32.totalorder %s12, 0
    %p74 = por %p72, %p73
    %p75 = scmp.ne.s32.totalorder %s67, %s69
    %p76 = scmp.eq.s32.totalorder %s17, 1
    %p77 = por %p75, %p76
    %p78 = scmp.ne.s32.totalorder %s69, %s70
    %p79 = scmp.eq.s32.totalorder %s17, 0
    %p80 = por %p78, %p79
    %p81 = scmp.ne.s32.totalorder %s69, %s70
    %p82 = scmp.eq.s32.totalorder %s18, 1
    %p83 = por %p81, %p82
    %p85 = scmp.ne.s32.totalorder %s70, %s84
    %p86 = scmp.eq.s32.totalorder %s18, 0
    %p87 = por %p85, %p86
    %s89 = sadd.s32 %s88, 1
    %p92 = scmp.eq.s32.totalorder %s12, 1
    %p93 = scmp.ne.s32.totalorder %s88, %s90
    %p94 = scmp.eq.s32.totalorder %s12, 0
    %p95 = por %p93, %p94
    %p96 = scmp.ne.s32.totalorder %s88, %s90
    %p97 = scmp.eq.s32.totalorder %s17, 1
    %p98 = por %p96, %p97
    %p99 = scmp.ne.s32.totalorder %s90, %s91
    %p100 = scmp.eq.s32.totalorder %s17, 0
    %p101 = por %p99, %p100
    %p102 = scmp.ne.s32.totalorder %s90, %s91
    %p103 = scmp.eq.s32.totalorder %s18, 1
    %p104 = por %p102, %p103
    %p106 = scmp.ne.s32.totalorder %s91, %s105
    %p107 = scmp.eq.s32.totalorder %s18, 0
    %p108 = por %p106, %p107
    %s110 = sadd.s32 %s109, 1
    %p113 = scmp.eq.s32.totalorder %s12, 1
    %p114 = scmp.ne.s32.totalorder %s109, %s111
    %p115 = scmp.eq.s32.totalorder %s12, 0
    %p116 = por %p114, %p115
    %p117 = scmp.ne.s32.totalorder %s109, %s111
    %p118 = scmp.eq.s32.totalorder %s17, 1
    %p119 = por %p117, %p118
    %p120 = scmp.ne.s32.totalorder %s111, %s112
    %p121 = scmp.eq.s32.totalorder %s17, 0
    %p122 = por %p120, %p121
    %p123 = scmp.ne.s32.totalorder %s111, %s112
    %p124 = scmp.eq.s32.totalorder %s18, 1
    %p125 = por %p123, %p124
    %p127 = scmp.ne.s32.totalorder %s112, %s126
    %p128 = scmp.eq.s32.totalorder %s18, 0
    %p129 = por %p127, %p128
    %s131 = sadd.s32 %s130, 1
    %p134 = scmp.eq.s32.totalorder %s12, 1
    %p135 = scmp.ne.s32.totalorder %s130, %s132
    %p136 = scmp.eq.s32.totalorder %s12, 0
    %p137 = por %p135, %p136
    %p138 = scmp.ne.s32.totalorder %s130, %s132
    %p139 = scmp.eq.s32.totalorder %s17, 1
    %p140 = por %p138, %p139
    %p141 = scmp.ne.s32.totalorder %s132, %s133
    %p142 = scmp.eq.s32.totalorder %s17, 0
    %p143 = por %p141, %p142
    %p144 = scmp.ne.s32.totalorder %s132, %s133
    %p145 = scmp.eq.s32.totalorder %s18, 1
    %p146 = por %p144, %p145
    %p148 = scmp.ne.s32.totalorder %s133, %s147
    %p149 = scmp.eq.s32.totalorder %s18, 0
    %p150 = por %p148, %p149
    %s151 = ssub.s32 %s12, %s19
    %p152 = scmp.eq.s32.totalorder %s151, 0
    %s154 = sadd.s32 %s153, 1
    %s155 = scalar_select %p152, %s153, %s154
    %p158 = pneg %p152
    %p159 = scmp.eq.s32.totalorder %s12, 1
    %p160 = por %p158, %p159
    %p161 = scmp.ne.s32.totalorder %s153, %s156
    %p162 = scmp.eq.s32.totalorder %s12, 0
    %p163 = por %p161, %p162
    %p164 = scmp.ne.s32.totalorder %s153, %s156
    %p165 = scmp.eq.s32.totalorder %s17, 1
    %p166 = por %p164, %p165
    %p167 = scmp.ne.s32.totalorder %s156, %s157
    %p168 = scmp.eq.s32.totalorder %s17, 0
    %p169 = por %p167, %p168
    %p170 = scmp.ne.s32.totalorder %s156, %s157
    %p171 = scmp.eq.s32.totalorder %s18, 1
    %p172 = por %p170, %p171
    %p174 = scmp.ne.s32.totalorder %s157, %s173
    %p175 = scmp.eq.s32.totalorder %s18, 0
    %p176 = por %p174, %p175
    %p177 = scmp.le.s32.totalorder 1, %s12
    %p178 = scmp.lt.s32.totalorder %s12, 3
    %p179 = pnand %p177, %p178
    %p180 = pneg %p179
    // Predicated region
    $region9: #{residual_forward.1} parent=5 // pred_check
      _
    $region10: #{residual_forward.1} parent=5 // pred_check_branch
      %182 = sbr.rel (%p179) target = $region12
    $region11: #{residual_forward.1} parent=5 // pred_region
      %s183 = ssub.s32 %s12, 1
      // Predicated region
      $region13: #{residual_forward.1} parent=11 // pred_check
        %p184 = pneg %p59
      $region14: #{residual_forward.1} parent=11 // pred_check_branch
        %186 = sbr.rel (%p184) target = $region16
      $region15: #{residual_forward.1} parent=11 // pred_region
        _
      $region16: #{residual_forward.1} parent=11 // pred_fallthru
        _
      // Predicated region
      $region17: #{residual_forward.1} parent=11 // pred_check
        %p187 = pneg %p80
      $region18: #{residual_forward.1} parent=11 // pred_check_branch
        %189 = sbr.rel (%p187) target = $region20
      $region19: #{residual_forward.1} parent=11 // pred_region
        _
      $region20: #{residual_forward.1} parent=11 // pred_fallthru
        _
      // Predicated region
      $region21: #{residual_forward.1} parent=11 // pred_check
        %p190 = pneg %p101
      $region22: #{residual_forward.1} parent=11 // pred_check_branch
        %192 = sbr.rel (%p190) target = $region24
      $region23: #{residual_forward.1} parent=11 // pred_region
        _
      $region24: #{residual_forward.1} parent=11 // pred_fallthru
        _
      // Predicated region
      $region25: #{residual_forward.1} parent=11 // pred_check
        %p193 = pneg %p122
      $region26: #{residual_forward.1} parent=11 // pred_check_branch
        %195 = sbr.rel (%p193) target = $region28
      $region27: #{residual_forward.1} parent=11 // pred_region
        _
      $region28: #{residual_forward.1} parent=11 // pred_fallthru
        _
      // Predicated region
      $region29: #{residual_forward.1} parent=11 // pred_check
        %p196 = pneg %p143
      $region30: #{residual_forward.1} parent=11 // pred_check_branch
        %198 = sbr.rel (%p196) target = $region32
      $region31: #{residual_forward.1} parent=11 // pred_region
        _
      $region32: #{residual_forward.1} parent=11 // pred_fallthru
        _
    $region12: #{residual_forward.1} parent=5 // pred_fallthru
      _
    %p199 = scmp.lt.s32.totalorder %s12, 2
    // Predicated region
    $region33: #{residual_forward.1} parent=5 // pred_check
      %p200 = pneg %p199
    $region34: #{residual_forward.1} parent=5 // pred_check_branch
      %202 = sbr.rel (%p200) target = $region36
    $region35: #{residual_forward.1} parent=5 // pred_region
      // Predicated region
      $region37: #{residual_forward.1} parent=35 // pred_check
        %p203 = pneg %p32
      $region38: #{residual_forward.1} parent=35 // pred_check_branch
        %205 = sbr.rel (%p203) target = $region40
      $region39: #{residual_forward.1} parent=35 // pred_region
        %s206 = smul.u32 36, %s12
        %p207 = scmp.lt.s32.totalorder %s206, 71
        %s208 = scalar_select %p207, %s206, 71
        %s209 = smul.addr %s208, 4
        %s210 = scalar_lea.vmem %s0, %s209
        %s211 = smul.u32 36, %s12
      $region40: #{residual_forward.1} parent=35 // pred_fallthru
        _
    $region36: #{residual_forward.1} parent=5 // pred_fallthru
      _
    %p212 = scmp.le.s32.totalorder 1, %s12
    %p213 = scmp.lt.s32.totalorder %s12, 3
    %p214 = pnand %p212, %p213
    %p215 = pneg %p214
    // Predicated region
    $region41: #{residual_forward.1} parent=5 // pred_check
      _
    $region42: #{residual_forward.1} parent=5 // pred_check_branch
      %217 = sbr.rel (%p214) target = $region44
    $region43: #{residual_forward.1} parent=5 // pred_region
      %s218 = ssub.s32 %s12, 1
      %s219 = smul.u32 36, %s17
      %p220 = scmp.lt.s32.totalorder %s219, 71
      %s221 = scalar_select %p220, %s219, 71
      %s222 = smul.addr %s221, 4
      %s223 = scalar_lea.vmem %s0, %s222
      %p224 = pneg %p38
      %p225 = pneg %p35
      %p226 = pneg %p59
      %p227 = pneg %p56
      %p228 = pneg %p80
      %p229 = pneg %p77
      %p230 = pneg %p101
      %p231 = pneg %p98
      %p232 = pneg %p122
      %p233 = pneg %p119
      %p234 = pneg %p143
      %p235 = pneg %p140
      %p236 = pneg %p169
      %p237 = pneg %p166
      %s238 = smul.u32 36, %s17
      %p239 = scmp.lt.s32.totalorder %s238, 71
      %s240 = scalar_select %p239, %s238, 71
      %s241 = smul.addr %s240, 8
      %s242 = scalar_lea.vmem %s6, %s241
      %s243 = smul.u32 36, %s17
      %p244 = scmp.lt.s32.totalorder %s243, 71
      %s245 = scalar_select %p244, %s243, 71
      %s246 = smul.addr %s245, 4
      %s247 = scalar_lea.vmem %s0, %s246
      %s248 = smul.u32 36, %s17
      %s249 = smul.u32 36, %s17
      %p250 = scmp.lt.s32.totalorder %s249, 71
      %s251 = scalar_select %p250, %s249, 71
      %s252 = smul.addr %s251, 8
      %s253 = scalar_lea.vmem %s6, %s252
      %s254 = smul.u32 36, %s17
      %v256 = vld [vmem:[%s247] sm:$0xf]
      %v257 = vld [vmem:[%s247 + $0x4] sm:$0xf]
      %v258 = vld [vmem:[%s247 + $0x8] sm:$0xf]
      %v259 = vld [vmem:[%s247 + $0xc] sm:$0xf]
      %v260 = vld [vmem:[%s247 + $0x10] sm:$0xf]
      %v261 = vld [vmem:[%s247 + $0x14] sm:$0xf]
      %v262 = vld [vmem:[%s247 + $0x18] sm:$0xf]
      %v263 = vld [vmem:[%s247 + $0x1c] sm:$0xf]
      %v264 = vld [vmem:[%s247 + $0x20] sm:$0xf]
      %v265 = vld [vmem:[%s247 + $0x24] sm:$0xf]
      %v266 = vld [vmem:[%s247 + $0x28] sm:$0xf]
      %v267 = vld [vmem:[%s247 + $0x2c] sm:$0xf]
      %v268 = vld [vmem:[%s247 + $0x30] sm:$0xf]
      %v269 = vld [vmem:[%s247 + $0x34] sm:$0xf]
      %v270 = vld [vmem:[%s247 + $0x38] sm:$0xf]
      %v271 = vld [vmem:[%s247 + $0x3c] sm:$0xf]
      %v272 = vld [vmem:[%s247 + $0x40] sm:$0xf]
      %v273 = vld [vmem:[%s247 + $0x44] sm:$0xf]
      %v274 = vld [vmem:[%s247 + $0x48] sm:$0xf]
      %v275 = vld [vmem:[%s247 + $0x4c] sm:$0xf]
      %v276 = vld [vmem:[%s247 + $0x50] sm:$0xf]
      %v277 = vld [vmem:[%s247 + $0x54] sm:$0xf]
      %v278 = vld [vmem:[%s247 + $0x58] sm:$0xf]
      %v279 = vld [vmem:[%s247 + $0x5c] sm:$0xf]
      %v280 = vld [vmem:[%s247 + $0x60] sm:$0xf]
      %v281 = vld [vmem:[%s247 + $0x64] sm:$0xf]
      %v282 = vld [vmem:[%s247 + $0x68] sm:$0xf]
      %v283 = vld [vmem:[%s247 + $0x6c] sm:$0xf]
      %v284 = vld [vmem:[%s247 + $0x70] sm:$0xf]
      %v285 = vld [vmem:[%s247 + $0x74] sm:$0xf]
      %v286 = vld [vmem:[%s247 + $0x78] sm:$0xf]
      %v287 = vld [vmem:[%s247 + $0x7c] sm:$0xf]
      %v288 = vld [vmem:[%s247 + $0x80] sm:$0xf]
      %v289 = vld [vmem:[%s247 + $0x84] sm:$0xf]
      %v290 = vld [vmem:[%s247 + $0x88] sm:$0xf]
      %v291 = vld [vmem:[%s247 + $0x8c] sm:$0xf]
      %v292 = vld [vmem:[%s2] sm:$0xf]
      %v293 = vld [vmem:[%s2 + $0x4] sm:$0xf]
      %v294 = vld [vmem:[%s2 + $0x8] sm:$0xf]
      %v295 = vld [vmem:[%s2 + $0xc] sm:$0xf]
      %v296 = vld [vmem:[%s2 + $0x10] sm:$0xf]
      %v297 = vld [vmem:[%s2 + $0x14] sm:$0xf]
      %v298 = vld [vmem:[%s2 + $0x18] sm:$0xf]
      %v299 = vld [vmem:[%s2 + $0x1c] sm:$0xf]
      %v300 = vld [vmem:[%s2 + $0x20] sm:$0xf]
      %v301 = vld [vmem:[%s2 + $0x24] sm:$0xf]
      %v302 = vld [vmem:[%s2 + $0x28] sm:$0xf]
      %v303 = vld [vmem:[%s2 + $0x2c] sm:$0xf]
      %v304 = vld [vmem:[%s2 + $0x30] sm:$0xf]
      %v305 = vld [vmem:[%s2 + $0x34] sm:$0xf]
      %v306 = vld [vmem:[%s2 + $0x38] sm:$0xf]
      %v307 = vld [vmem:[%s2 + $0x3c] sm:$0xf]
      %s308 = scalar_lea.vmem %s2, 64
      %v309 = vld [vmem:[%s308] sm:$0xf]
      %v310 = vld [vmem:[%s308 + $0x4] sm:$0xf]
      %v311 = vld [vmem:[%s308 + $0x8] sm:$0xf]
      %v312 = vld [vmem:[%s308 + $0xc] sm:$0xf]
      %v313 = vld [vmem:[%s308 + $0x10] sm:$0xf]
      %v314 = vld [vmem:[%s308 + $0x14] sm:$0xf]
      %v315 = vld [vmem:[%s308 + $0x18] sm:$0xf]
      %v316 = vld [vmem:[%s308 + $0x1c] sm:$0xf]
      %v317 = vld [vmem:[%s308 + $0x20] sm:$0xf]
      %v318 = vld [vmem:[%s308 + $0x24] sm:$0xf]
      %v319 = vld [vmem:[%s308 + $0x28] sm:$0xf]
      %v320 = vld [vmem:[%s308 + $0x2c] sm:$0xf]
      %v321 = vld [vmem:[%s308 + $0x30] sm:$0xf]
      %v322 = vld [vmem:[%s308 + $0x34] sm:$0xf]
      %v323 = vld [vmem:[%s308 + $0x38] sm:$0xf]
      %v324 = vld [vmem:[%s308 + $0x3c] sm:$0xf]
      %v361 = vunpack.c.l.b16 %v256
      %v362 = vunpack.c.l.b16 %v257
      %v363 = vunpack.c.l.b16 %v258
      %v364 = vunpack.c.l.b16 %v259
      %v365 = vunpack.c.l.b16 %v260
      %v366 = vunpack.c.l.b16 %v261
      %v367 = vunpack.c.l.b16 %v262
      %v368 = vunpack.c.l.b16 %v263
      %v369 = vunpack.c.l.b16 %v264
      %v370 = vunpack.c.l.b16 %v265
      %v371 = vunpack.c.l.b16 %v266
      %v372 = vunpack.c.l.b16 %v267
      %v373 = vunpack.c.l.b16 %v268
      %v374 = vunpack.c.l.b16 %v269
      %v375 = vunpack.c.l.b16 %v270
      %v376 = vunpack.c.l.b16 %v271
      %v377 = vunpack.c.l.b16 %v272
      %v378 = vunpack.c.l.b16 %v273
      %v379 = vunpack.c.l.b16 %v274
      %v380 = vunpack.c.l.b16 %v275
      %v381 = vunpack.c.l.b16 %v276
      %v382 = vunpack.c.l.b16 %v277
      %v383 = vunpack.c.l.b16 %v278
      %v384 = vunpack.c.l.b16 %v279
      %v385 = vunpack.c.l.b16 %v280
      %v386 = vunpack.c.l.b16 %v281
      %v387 = vunpack.c.l.b16 %v282
      %v388 = vunpack.c.l.b16 %v283
      %v389 = vunpack.c.l.b16 %v284
      %v390 = vunpack.c.l.b16 %v285
      %v391 = vunpack.c.l.b16 %v286
      %v392 = vunpack.c.l.b16 %v287
      %v393 = vunpack.c.l.b16 %v288
      %v394 = vunpack.c.l.b16 %v289
      %v395 = vunpack.c.l.b16 %v290
      %v396 = vunpack.c.l.b16 %v291
      %v397 = vpack.c.b16 %v362, %v361
      %v398 = vpack.c.b16 %v364, %v363
      %v399 = vpack.c.b16 %v366, %v365
      %v400 = vpack.c.b16 %v368, %v367
      %v401 = vpack.c.b16 %v370, %v369
      %v402 = vpack.c.b16 %v372, %v371
      %v403 = vpack.c.b16 %v374, %v373
      %v404 = vpack.c.b16 %v376, %v375
      %v405 = vpack.c.b16 %v378, %v377
      %v406 = vpack.c.b16 %v380, %v379
      %v407 = vpack.c.b16 %v382, %v381
      %v408 = vpack.c.b16 %v384, %v383
      %v409 = vpack.c.b16 %v386, %v385
      %v410 = vpack.c.b16 %v388, %v387
      %v411 = vpack.c.b16 %v390, %v389
      %v412 = vpack.c.b16 %v392, %v391
      %v413 = vpack.c.b16 %v394, %v393
      %v414 = vpack.c.b16 %v396, %v395
      %vm415 = vsmask.f32 7424
      %v417 = vshrl.u32 %v397, 16
      %v419 = vshll.u32 %v397, 16
      %v421 = vrot.slane %v419, 1
      %v422 = vor.u32 %v417, %v421
      %v424 = vshll.u32 %v398, 16
      %v426 = vrot.slane %v424, 1
      %v427 = vsel %vm415, %v422, %v426
      %v428 = vshrl.u32 %v398, 16
      %v430 = vor.u32 %v428, %v426
      %v432 = vshll.u32 %v399, 16
      %v434 = vrot.slane %v432, 1
      %v435 = vsel %vm415, %v430, %v434
      %v436 = vshrl.u32 %v399, 16
      %v438 = vor.u32 %v436, %v434
      %v440 = vshll.u32 %v400, 16
      %v442 = vrot.slane %v440, 1
      %v443 = vsel %vm415, %v438, %v442
      %v444 = vshrl.u32 %v400, 16
      %v446 = vor.u32 %v444, %v442
      %v448 = vshll.u32 %v401, 16
      %v450 = vrot.slane %v448, 1
      %v451 = vsel %vm415, %v446, %v450
      %v452 = vshrl.u32 %v401, 16
      %v454 = vor.u32 %v452, %v450
      %v456 = vshll.u32 %v402, 16
      %v458 = vrot.slane %v456, 1
      %v459 = vsel %vm415, %v454, %v458
      %v460 = vshrl.u32 %v402, 16
      %v462 = vor.u32 %v460, %v458
      %v464 = vshll.u32 %v403, 16
      %v466 = vrot.slane %v464, 1
      %v467 = vsel %vm415, %v462, %v466
      %v468 = vshrl.u32 %v403, 16
      %v470 = vor.u32 %v468, %v466
      %v472 = vshll.u32 %v404, 16
      %v474 = vrot.slane %v472, 1
      %v475 = vsel %vm415, %v470, %v474
      %v476 = vshrl.u32 %v404, 16
      %v478 = vor.u32 %v476, %v474
      %v480 = vshll.u32 %v405, 16
      %v482 = vrot.slane %v480, 1
      %v483 = vsel %vm415, %v478, %v482
      %v484 = vshrl.u32 %v405, 16
      %v486 = vor.u32 %v484, %v482
      %v488 = vshll.u32 %v406, 16
      %v490 = vrot.slane %v488, 1
      %v491 = vsel %vm415, %v486, %v490
      %v492 = vshrl.u32 %v406, 16
      %v494 = vor.u32 %v492, %v490
      %v496 = vshll.u32 %v407, 16
      %v498 = vrot.slane %v496, 1
      %v499 = vsel %vm415, %v494, %v498
      %v500 = vshrl.u32 %v407, 16
      %v502 = vor.u32 %v500, %v498
      %v504 = vshll.u32 %v408, 16
      %v506 = vrot.slane %v504, 1
      %v507 = vsel %vm415, %v502, %v506
      %v508 = vshrl.u32 %v408, 16
      %v510 = vor.u32 %v508, %v506
      %v512 = vshll.u32 %v409, 16
      %v514 = vrot.slane %v512, 1
      %v515 = vsel %vm415, %v510, %v514
      %v516 = vshrl.u32 %v409, 16
      %v518 = vor.u32 %v516, %v514
      %v520 = vshll.u32 %v410, 16
      %v522 = vrot.slane %v520, 1
      %v523 = vsel %vm415, %v518, %v522
      %v524 = vshrl.u32 %v410, 16
      %v526 = vor.u32 %v524, %v522
      %v528 = vshll.u32 %v411, 16
      %v530 = vrot.slane %v528, 1
      %v531 = vsel %vm415, %v526, %v530
      %v532 = vshrl.u32 %v411, 16
      %v534 = vor.u32 %v532, %v530
      %v536 = vshll.u32 %v412, 16
      %v538 = vrot.slane %v536, 1
      %v539 = vsel %vm415, %v534, %v538
      %v540 = vshrl.u32 %v412, 16
      %v542 = vor.u32 %v540, %v538
      %v544 = vshll.u32 %v413, 16
      %v546 = vrot.slane %v544, 1
      %v547 = vsel %vm415, %v542, %v546
      %v548 = vshrl.u32 %v413, 16
      %v550 = vor.u32 %v548, %v546
      %v552 = vshll.u32 %v414, 16
      %v554 = vrot.slane %v552, 1
      %v555 = vsel %vm415, %v550, %v554
      %v556 = vshrl.u32 %v414, 16
      %v558 = vor.u32 %v556, %v554
      %v593 = vunpack.c.l.b16 %v309
      %v594 = vunpack.c.l.b16 %v310
      %v595 = vunpack.c.l.b16 %v311
      %v596 = vunpack.c.l.b16 %v312
      %v597 = vunpack.c.l.b16 %v313
      %v598 = vunpack.c.l.b16 %v314
      %v599 = vunpack.c.l.b16 %v315
      %v600 = vunpack.c.l.b16 %v316
      %v601 = vunpack.c.l.b16 %v317
      %v602 = vunpack.c.l.b16 %v318
      %v603 = vunpack.c.l.b16 %v319
      %v604 = vunpack.c.l.b16 %v320
      %v605 = vunpack.c.l.b16 %v321
      %v606 = vunpack.c.l.b16 %v322
      %v607 = vunpack.c.l.b16 %v323
      %v608 = vunpack.c.l.b16 %v324
      %v609 = vpack.c.b16 %v594, %v593
      %v610 = vpack.c.b16 %v596, %v595
      %v611 = vpack.c.b16 %v598, %v597
      %v612 = vpack.c.b16 %v600, %v599
      %v613 = vpack.c.b16 %v602, %v601
      %v614 = vpack.c.b16 %v604, %v603
      %v615 = vpack.c.b16 %v606, %v605
      %v616 = vpack.c.b16 %v608, %v607
      %625 = vmatprep.subr.bf16.mxu0 0
      %626 = vmatpush1.bf16.msra.mxu0 %v609
      %627 = vmatprep.subr.bf16.mxu0 0
      %628 = vmatpush1.bf16.msra.mxu0 %v610
      %629 = vmatprep.subr.bf16.mxu0 0
      %630 = vmatpush1.bf16.msra.mxu0 %v611
      %631 = vmatprep.subr.bf16.mxu0 0
      %632 = vmatpush1.bf16.msra.mxu0 %v612
      %633 = vmatprep.subr.bf16.mxu0 0
      %634 = vmatpush1.bf16.msra.mxu0 %v613
      %635 = vmatprep.subr.bf16.mxu0 0
      %636 = vmatpush1.bf16.msra.mxu0 %v614
      %637 = vmatprep.subr.bf16.mxu0 0
      %638 = vmatpush1.bf16.msra.mxu0 %v615
      %639 = vmatprep.subr.bf16.mxu0 0
      %640 = vmatpush1.bf16.msra.mxu0 %v616
      %641 = vmatprep.subr.bf16.mxu0 0
      %642 = vmatpush1.bf16.msra.mxu0 0
      %643 = vmatprep.subr.bf16.mxu0 0
      %644 = vmatpush1.bf16.msra.mxu0 0
      %645 = vmatprep.subr.bf16.mxu0 0
      %646 = vmatpush1.bf16.msra.mxu0 0
      %647 = vmatprep.subr.bf16.mxu0 0
      %648 = vmatpush1.bf16.msra.mxu0 0
      %649 = vmatprep.subr.bf16.mxu0 0
      %650 = vmatpush1.bf16.msra.mxu0 0
      %651 = vmatprep.subr.bf16.mxu0 0
      %652 = vmatpush1.bf16.msra.mxu0 0
      %653 = vmatprep.subr.bf16.mxu0 0
      %654 = vmatpush1.bf16.msra.mxu0 0
      %655 = vmatprep.subr.bf16.mxu0 0
      %656 = vmatpush1.bf16.msra.mxu0 0
      %657 = vmatprep.mubr.bf16.mxu0 0
      %658 = vmatmul.mubr.bf16.gmra.mrb[0].mxu0 %v427
      %v659 = vpop.f32.mrb[0].mxu0
      %v660 = vadd.f32 0.0, %v659
      %v661 = vpop.f32.mrb[0].mxu0
      %v662 = vpop.f32.mrb[0].mxu0
      %v663 = vadd.f32 0.0, %v662
      %v664 = vpop.f32.mrb[0].mxu0
      %665 = vmatprep.mubr.bf16.mxu0 0
      %666 = vmatmul.mubr.bf16.gmra.mrb[0].mxu0 %v435
      %v667 = vpop.f32.mrb[0].mxu0
      %v668 = vadd.f32 0.0, %v667
      %v669 = vpop.f32.mrb[0].mxu0
      %v670 = vpop.f32.mrb[0].mxu0
      %v671 = vadd.f32 0.0, %v670
      %v672 = vpop.f32.mrb[0].mxu0
      %673 = vmatprep.mubr.bf16.mxu0 0
      %674 = vmatmul.mubr.bf16.gmra.mrb[0].mxu0 %v443
      %v675 = vpop.f32.mrb[0].mxu0
      %v676 = vadd.f32 0.0, %v675
      %v677 = vpop.f32.mrb[0].mxu0
      %v678 = vpop.f32.mrb[0].mxu0
      %v679 = vadd.f32 0.0, %v678
      %v680 = vpop.f32.mrb[0].mxu0
      %681 = vmatprep.mubr.bf16.mxu0 0
      %682 = vmatmul.mubr.bf16.gmra.mrb[0].mxu0 %v451
      %v683 = vpop.f32.mrb[0].mxu0
      %v684 = vadd.f32 0.0, %v683
      %v685 = vpop.f32.mrb[0].mxu0
      %v686 = vpop.f32.mrb[0].mxu0
      %v687 = vadd.f32 0.0, %v686
      %v688 = vpop.f32.mrb[0].mxu0
      %689 = vmatprep.mubr.bf16.mxu0 0
      %690 = vmatmul.mubr.bf16.gmra.mrb[0].mxu0 %v459
      %v691 = vpop.f32.mrb[0].mxu0
      %v692 = vadd.f32 0.0, %v691
      %v693 = vpop.f32.mrb[0].mxu0
      %v694 = vpop.f32.mrb[0].mxu0
      %v695 = vadd.f32 0.0, %v694
      %v696 = vpop.f32.mrb[0].mxu0
      %697 = vmatprep.mubr.bf16.mxu0 0
      %698 = vmatmul.mubr.bf16.gmra.mrb[0].mxu0 %v467
      %v699 = vpop.f32.mrb[0].mxu0
      %v700 = vadd.f32 0.0, %v699
      %v701 = vpop.f32.mrb[0].mxu0
      %v702 = vpop.f32.mrb[0].mxu0
      %v703 = vadd.f32 0.0, %v702
      %v704 = vpop.f32.mrb[0].mxu0
      %705 = vmatprep.mubr.bf16.mxu0 0
      %706 = vmatmul.mubr.bf16.gmra.mrb[0].mxu0 %v475
      %v707 = vpop.f32.mrb[0].mxu0
      %v708 = vadd.f32 0.0, %v707
      %v709 = vpop.f32.mrb[0].mxu0
      %v710 = vpop.f32.mrb[0].mxu0
      %v711 = vadd.f32 0.0, %v710
      %v712 = vpop.f32.mrb[0].mxu0
      %713 = vmatprep.mubr.bf16.mxu0 0
      %714 = vmatmul.mubr.bf16.gmra.mrb[0].mxu0 %v483
      %v715 = vpop.f32.mrb[0].mxu0
      %v716 = vadd.f32 0.0, %v715
      %v717 = vpop.f32.mrb[0].mxu0
      %v718 = vpop.f32.mrb[0].mxu0
      %v719 = vadd.f32 0.0, %v718
      %v720 = vpop.f32.mrb[0].mxu0
      %721 = vmatprep.mubr.bf16.mxu0 0
      %722 = vmatmul.mubr.bf16.gmra.mrb[0].mxu0 %v491
      %v723 = vpop.f32.mrb[0].mxu0
      %v724 = vadd.f32 0.0, %v723
      %v725 = vpop.f32.mrb[0].mxu0
      %v726 = vpop.f32.mrb[0].mxu0
      %v727 = vadd.f32 0.0, %v726
      %v728 = vpop.f32.mrb[0].mxu0
      %729 = vmatprep.mubr.bf16.mxu0 0
      %730 = vmatmul.mubr.bf16.gmra.mrb[0].mxu0 %v499
      %v731 = vpop.f32.mrb[0].mxu0
      %v732 = vadd.f32 0.0, %v731
      %v733 = vpop.f32.mrb[0].mxu0
      %v734 = vpop.f32.mrb[0].mxu0
      %v735 = vadd.f32 0.0, %v734
      %v736 = vpop.f32.mrb[0].mxu0
      %737 = vmatprep.mubr.bf16.mxu0 0
      %738 = vmatmul.mubr.bf16.gmra.mrb[0].mxu0 %v507
      %v739 = vpop.f32.mrb[0].mxu0
      %v740 = vadd.f32 0.0, %v739
      %v741 = vpop.f32.mrb[0].mxu0
      %v742 = vpop.f32.mrb[0].mxu0
      %v743 = vadd.f32 0.0, %v742
      %v744 = vpop.f32.mrb[0].mxu0
      %745 = vmatprep.mubr.bf16.mxu0 0
      %746 = vmatmul.mubr.bf16.gmra.mrb[0].mxu0 %v515
      %v747 = vpop.f32.mrb[0].mxu0
      %v748 = vadd.f32 0.0, %v747
      %v749 = vpop.f32.mrb[0].mxu0
      %v750 = vpop.f32.mrb[0].mxu0
      %v751 = vadd.f32 0.0, %v750
      %v752 = vpop.f32.mrb[0].mxu0
      %753 = vmatprep.mubr.bf16.mxu0 0
      %754 = vmatmul.mubr.bf16.gmra.mrb[0].mxu0 %v523
      %v755 = vpop.f32.mrb[0].mxu0
      %v756 = vadd.f32 0.0, %v755
      %v757 = vpop.f32.mrb[0].mxu0
      %v758 = vpop.f32.mrb[0].mxu0
      %v759 = vadd.f32 0.0, %v758
      %v760 = vpop.f32.mrb[0].mxu0
      %761 = vmatprep.mubr.bf16.mxu0 0
      %762 = vmatmul.mubr.bf16.gmra.mrb[0].mxu0 %v531
      %v763 = vpop.f32.mrb[0].mxu0
      %v764 = vadd.f32 0.0, %v763
      %v765 = vpop.f32.mrb[0].mxu0
      %v766 = vpop.f32.mrb[0].mxu0
      %v767 = vadd.f32 0.0, %v766
      %v768 = vpop.f32.mrb[0].mxu0
      %769 = vmatprep.mubr.bf16.mxu0 0
      %770 = vmatmul.mubr.bf16.gmra.mrb[0].mxu0 %v539
      %v771 = vpop.f32.mrb[0].mxu0
      %v772 = vadd.f32 0.0, %v771
      %v773 = vpop.f32.mrb[0].mxu0
      %v774 = vpop.f32.mrb[0].mxu0
      %v775 = vadd.f32 0.0, %v774
      %v776 = vpop.f32.mrb[0].mxu0
      %777 = vmatprep.mubr.bf16.mxu0 0
      %778 = vmatmul.mubr.bf16.gmra.mrb[0].mxu0 %v547
      %v779 = vpop.f32.mrb[0].mxu0
      %v780 = vadd.f32 0.0, %v779
      %v781 = vpop.f32.mrb[0].mxu0
      %v782 = vpop.f32.mrb[0].mxu0
      %v783 = vadd.f32 0.0, %v782
      %v784 = vpop.f32.mrb[0].mxu0
      %785 = vmatprep.mubr.bf16.mxu0 0
      %786 = vmatmul.mubr.bf16.gmra.mrb[0].mxu0 %v555
      %v787 = vpop.f32.mrb[0].mxu0
      %v788 = vadd.f32 0.0, %v787
      %v789 = vpop.f32.mrb[0].mxu0
      %v790 = vpop.f32.mrb[0].mxu0
      %v791 = vadd.f32 0.0, %v790
      %v792 = vpop.f32.mrb[0].mxu0
      %793 = vmatprep.mubr.bf16.mxu0 0
      %794 = vmatmul.mubr.bf16.gmra.mrb[0].mxu0 %v558
      %v795 = vpop.f32.mrb[0].mxu0
      %v796 = vadd.f32 0.0, %v795
      %v797 = vpop.f32.mrb[0].mxu0
      %v798 = vpop.f32.mrb[0].mxu0
      %v799 = vadd.f32 0.0, %v798
      %v800 = vpop.f32.mrb[0].mxu0
      %801 = vdwg.mxu0
      %v836 = vunpack.c.l.b16 %v292
      %v837 = vunpack.c.l.b16 %v293
      %v838 = vunpack.c.l.b16 %v294
      %v839 = vunpack.c.l.b16 %v295
      %v840 = vunpack.c.l.b16 %v296
      %v841 = vunpack.c.l.b16 %v297
      %v842 = vunpack.c.l.b16 %v298
      %v843 = vunpack.c.l.b16 %v299
      %v844 = vunpack.c.l.b16 %v300
      %v845 = vunpack.c.l.b16 %v301
      %v846 = vunpack.c.l.b16 %v302
      %v847 = vunpack.c.l.b16 %v303
      %v848 = vunpack.c.l.b16 %v304
      %v849 = vunpack.c.l.b16 %v305
      %v850 = vunpack.c.l.b16 %v306
      %v851 = vunpack.c.l.b16 %v307
      %v852 = vpack.c.b16 %v837, %v836
      %v853 = vpack.c.b16 %v839, %v838
      %v854 = vpack.c.b16 %v841, %v840
      %v855 = vpack.c.b16 %v843, %v842
      %v856 = vpack.c.b16 %v845, %v844
      %v857 = vpack.c.b16 %v847, %v846
      %v858 = vpack.c.b16 %v849, %v848
      %v859 = vpack.c.b16 %v851, %v850
      %868 = vmatprep.subr.bf16.mxu0 0
      %869 = vmatpush1.bf16.msra.mxu0 %v852
      %870 = vmatprep.subr.bf16.mxu0 0
      %871 = vmatpush1.bf16.msra.mxu0 %v853
      %872 = vmatprep.subr.bf16.mxu0 0
      %873 = vmatpush1.bf16.msra.mxu0 %v854
      %874 = vmatprep.subr.bf16.mxu0 0
      %875 = vmatpush1.bf16.msra.mxu0 %v855
      %876 = vmatprep.subr.bf16.mxu0 0
      %877 = vmatpush1.bf16.msra.mxu0 %v856
      %878 = vmatprep.subr.bf16.mxu0 0
      %879 = vmatpush1.bf16.msra.mxu0 %v857
      %880 = vmatprep.subr.bf16.mxu0 0
      %881 = vmatpush1.bf16.msra.mxu0 %v858
      %882 = vmatprep.subr.bf16.mxu0 0
      %883 = vmatpush1.bf16.msra.mxu0 %v859
      %884 = vmatprep.subr.bf16.mxu0 0
      %885 = vmatpush1.bf16.msra.mxu0 0
      %886 = vmatprep.subr.bf16.mxu0 0
      %887 = vmatpush1.bf16.msra.mxu0 0
      %888 = vmatprep.subr.bf16.mxu0 0
      %889 = vmatpush1.bf16.msra.mxu0 0
      %890 = vmatprep.subr.bf16.mxu0 0
      %891 = vmatpush1.bf16.msra.mxu0 0
      %892 = vmatprep.subr.bf16.mxu0 0
      %893 = vmatpush1.bf16.msra.mxu0 0
      %894 = vmatprep.subr.bf16.mxu0 0
      %895 = vmatpush1.bf16.msra.mxu0 0
      %896 = vmatprep.subr.bf16.mxu0 0
      %897 = vmatpush1.bf16.msra.mxu0 0
      %898 = vmatprep.subr.bf16.mxu0 0
      %899 = vmatpush1.bf16.msra.mxu0 0
      %900 = vmatprep.mubr.bf16.mxu0 0
      %901 = vmatmul.mubr.bf16.gmra.mrb[0].mxu0 %v397
      %v902 = vpop.f32.mrb[0].mxu0
      %v903 = vadd.f32 %v660, %v902
      %v904 = vpop.f32.mrb[0].mxu0
      %v905 = vpop.f32.mrb[0].mxu0
      %v906 = vadd.f32 %v663, %v905
      %v907 = vpop.f32.mrb[0].mxu0
      %908 = vmatprep.mubr.bf16.mxu0 0
      %909 = vmatmul.mubr.bf16.gmra.mrb[0].mxu0 %v398
      %v910 = vpop.f32.mrb[0].mxu0
      %v911 = vadd.f32 %v668, %v910
      %v912 = vpop.f32.mrb[0].mxu0
      %v913 = vpop.f32.mrb[0].mxu0
      %v914 = vadd.f32 %v671, %v913
      %v915 = vpop.f32.mrb[0].mxu0
      %916 = vmatprep.mubr.bf16.mxu0 0
      %917 = vmatmul.mubr.bf16.gmra.mrb[0].mxu0 %v399
      %v918 = vpop.f32.mrb[0].mxu0
      %v919 = vadd.f32 %v676, %v918
      %v920 = vpop.f32.mrb[0].mxu0
      %v921 = vpop.f32.mrb[0].mxu0
      %v922 = vadd.f32 %v679, %v921
      %v923 = vpop.f32.mrb[0].mxu0
      %924 = vmatprep.mubr.bf16.mxu0 0
      %925 = vmatmul.mubr.bf16.gmra.mrb[0].mxu0 %v400
      %v926 = vpop.f32.mrb[0].mxu0
      %v927 = vadd.f32 %v684, %v926
      %v928 = vpop.f32.mrb[0].mxu0
      %v929 = vpop.f32.mrb[0].mxu0
      %v930 = vadd.f32 %v687, %v929
      %v931 = vpop.f32.mrb[0].mxu0
      %932 = vmatprep.mubr.bf16.mxu0 0
      %933 = vmatmul.mubr.bf16.gmra.mrb[0].mxu0 %v401
      %v934 = vpop.f32.mrb[0].mxu0
      %v935 = vadd.f32 %v692, %v934
      %v936 = vpop.f32.mrb[0].mxu0
      %v937 = vpop.f32.mrb[0].mxu0
      %v938 = vadd.f32 %v695, %v937
      %v939 = vpop.f32.mrb[0].mxu0
      %940 = vmatprep.mubr.bf16.mxu0 0
      %941 = vmatmul.mubr.bf16.gmra.mrb[0].mxu0 %v402
      %v942 = vpop.f32.mrb[0].mxu0
      %v943 = vadd.f32 %v700, %v942
      %v944 = vpop.f32.mrb[0].mxu0
      %v945 = vpop.f32.mrb[0].mxu0
      %v946 = vadd.f32 %v703, %v945
      %v947 = vpop.f32.mrb[0].mxu0
      %948 = vmatprep.mubr.bf16.mxu0 0
      %949 = vmatmul.mubr.bf16.gmra.mrb[0].mxu0 %v403
      %v950 = vpop.f32.mrb[0].mxu0
      %v951 = vadd.f32 %v708, %v950
      %v952 = vpop.f32.mrb[0].mxu0
      %v953 = vpop.f32.mrb[0].mxu0
      %v954 = vadd.f32 %v711, %v953
      %v955 = vpop.f32.mrb[0].mxu0
      %956 = vmatprep.mubr.bf16.mxu0 0
      %957 = vmatmul.mubr.bf16.gmra.mrb[0].mxu0 %v404
      %v958 = vpop.f32.mrb[0].mxu0
      %v959 = vadd.f32 %v716, %v958
      %v960 = vpop.f32.mrb[0].mxu0
      %v961 = vpop.f32.mrb[0].mxu0
      %v962 = vadd.f32 %v719, %v961
      %v963 = vpop.f32.mrb[0].mxu0
      %964 = vmatprep.mubr.bf16.mxu0 0
      %965 = vmatmul.mubr.bf16.gmra.mrb[0].mxu0 %v405
      %v966 = vpop.f32.mrb[0].mxu0
      %v967 = vadd.f32 %v724, %v966
      %v968 = vpop.f32.mrb[0].mxu0
      %v969 = vpop.f32.mrb[0].mxu0
      %v970 = vadd.f32 %v727, %v969
      %v971 = vpop.f32.mrb[0].mxu0
      %972 = vmatprep.mubr.bf16.mxu0 0
      %973 = vmatmul.mubr.bf16.gmra.mrb[0].mxu0 %v406
      %v974 = vpop.f32.mrb[0].mxu0
      %v975 = vadd.f32 %v732, %v974
      %v976 = vpop.f32.mrb[0].mxu0
      %v977 = vpop.f32.mrb[0].mxu0
      %v978 = vadd.f32 %v735, %v977
      %v979 = vpop.f32.mrb[0].mxu0
      %980 = vmatprep.mubr.bf16.mxu0 0
      %981 = vmatmul.mubr.bf16.gmra.mrb[0].mxu0 %v407
      %v982 = vpop.f32.mrb[0].mxu0
      %v983 = vadd.f32 %v740, %v982
      %v984 = vpop.f32.mrb[0].mxu0
      %v985 = vpop.f32.mrb[0].mxu0
      %v986 = vadd.f32 %v743, %v985
      %v987 = vpop.f32.mrb[0].mxu0
      %988 = vmatprep.mubr.bf16.mxu0 0
      %989 = vmatmul.mubr.bf16.gmra.mrb[0].mxu0 %v408
      %v990 = vpop.f32.mrb[0].mxu0
      %v991 = vadd.f32 %v748, %v990
      %v992 = vpop.f32.mrb[0].mxu0
      %v993 = vpop.f32.mrb[0].mxu0
      %v994 = vadd.f32 %v751, %v993
      %v995 = vpop.f32.mrb[0].mxu0
      %996 = vmatprep.mubr.bf16.mxu0 0
      %997 = vmatmul.mubr.bf16.gmra.mrb[0].mxu0 %v409
      %v998 = vpop.f32.mrb[0].mxu0
      %v999 = vadd.f32 %v756, %v998
      %v1000 = vpop.f32.mrb[0].mxu0
      %v1001 = vpop.f32.mrb[0].mxu0
      %v1002 = vadd.f32 %v759, %v1001
      %v1003 = vpop.f32.mrb[0].mxu0
      %1004 = vmatprep.mubr.bf16.mxu0 0
      %1005 = vmatmul.mubr.bf16.gmra.mrb[0].mxu0 %v410
      %v1006 = vpop.f32.mrb[0].mxu0
      %v1007 = vadd.f32 %v764, %v1006
      %v1008 = vpop.f32.mrb[0].mxu0
      %v1009 = vpop.f32.mrb[0].mxu0
      %v1010 = vadd.f32 %v767, %v1009
      %v1011 = vpop.f32.mrb[0].mxu0
      %1012 = vmatprep.mubr.bf16.mxu0 0
      %1013 = vmatmul.mubr.bf16.gmra.mrb[0].mxu0 %v411
      %v1014 = vpop.f32.mrb[0].mxu0
      %v1015 = vadd.f32 %v772, %v1014
      %v1016 = vpop.f32.mrb[0].mxu0
      %v1017 = vpop.f32.mrb[0].mxu0
      %v1018 = vadd.f32 %v775, %v1017
      %v1019 = vpop.f32.mrb[0].mxu0
      %1020 = vmatprep.mubr.bf16.mxu0 0
      %1021 = vmatmul.mubr.bf16.gmra.mrb[0].mxu0 %v412
      %v1022 = vpop.f32.mrb[0].mxu0
      %v1023 = vadd.f32 %v780, %v1022
      %v1024 = vpop.f32.mrb[0].mxu0
      %v1025 = vpop.f32.mrb[0].mxu0
      %v1026 = vadd.f32 %v783, %v1025
      %v1027 = vpop.f32.mrb[0].mxu0
      %1028 = vmatprep.mubr.bf16.mxu0 0
      %1029 = vmatmul.mubr.bf16.gmra.mrb[0].mxu0 %v413
      %v1030 = vpop.f32.mrb[0].mxu0
      %v1031 = vadd.f32 %v788, %v1030
      %v1032 = vpop.f32.mrb[0].mxu0
      %v1033 = vpop.f32.mrb[0].mxu0
      %v1034 = vadd.f32 %v791, %v1033
      %v1035 = vpop.f32.mrb[0].mxu0
      %1036 = vmatprep.mubr.bf16.mxu0 0
      %1037 = vmatmul.mubr.bf16.gmra.mrb[0].mxu0 %v414
      %v1038 = vpop.f32.mrb[0].mxu0
      %v1039 = vadd.f32 %v796, %v1038
      %v1040 = vpop.f32.mrb[0].mxu0
      %v1041 = vpop.f32.mrb[0].mxu0
      %v1042 = vadd.f32 %v799, %v1041
      %v1043 = vpop.f32.mrb[0].mxu0
      %1044 = vdwg.mxu0
      %s1045 = scalar_lea.vmem %s2, 128
      %v1046 = vld [vmem:[%s1045] sm:$0xf]
      %v1047 = vld [vmem:[%s1045 + $0x4] sm:$0xf]
      %v1048 = vld [vmem:[%s1045 + $0x8] sm:$0xf]
      %v1049 = vld [vmem:[%s1045 + $0xc] sm:$0xf]
      %v1050 = vld [vmem:[%s1045 + $0x10] sm:$0xf]
      %v1051 = vld [vmem:[%s1045 + $0x14] sm:$0xf]
      %v1052 = vld [vmem:[%s1045 + $0x18] sm:$0xf]
      %v1053 = vld [vmem:[%s1045 + $0x1c] sm:$0xf]
      %v1054 = vld [vmem:[%s1045 + $0x20] sm:$0xf]
      %v1055 = vld [vmem:[%s1045 + $0x24] sm:$0xf]
      %v1056 = vld [vmem:[%s1045 + $0x28] sm:$0xf]
      %v1057 = vld [vmem:[%s1045 + $0x2c] sm:$0xf]
      %v1058 = vld [vmem:[%s1045 + $0x30] sm:$0xf]
      %v1059 = vld [vmem:[%s1045 + $0x34] sm:$0xf]
      %v1060 = vld [vmem:[%s1045 + $0x38] sm:$0xf]
      %v1061 = vld [vmem:[%s1045 + $0x3c] sm:$0xf]
      %vm1062 = vcmask 1046528
      %v1063 = vrot.slane %v397, 1
      %v1064 = vrot.slane %v398, 1
      %v1065 = vsel %vm1062, %v1063, %v1064
      %v1066 = vrot.slane %v399, 1
      %v1067 = vsel %vm1062, %v1064, %v1066
      %v1068 = vrot.slane %v400, 1
      %v1069 = vsel %vm1062, %v1066, %v1068
      %v1070 = vrot.slane %v401, 1
      %v1071 = vsel %vm1062, %v1068, %v1070
      %v1072 = vrot.slane %v402, 1
      %v1073 = vsel %vm1062, %v1070, %v1072
      %v1074 = vrot.slane %v403, 1
      %v1075 = vsel %vm1062, %v1072, %v1074
      %v1076 = vrot.slane %v404, 1
      %v1077 = vsel %vm1062, %v1074, %v1076
      %v1078 = vrot.slane %v405, 1
      %v1079 = vsel %vm1062, %v1076, %v1078
      %v1080 = vrot.slane %v406, 1
      %v1081 = vsel %vm1062, %v1078, %v1080
      %v1082 = vrot.slane %v407, 1
      %v1083 = vsel %vm1062, %v1080, %v1082
      %v1084 = vrot.slane %v408, 1
      %v1085 = vsel %vm1062, %v1082, %v1084
      %v1086 = vrot.slane %v409, 1
      %v1087 = vsel %vm1062, %v1084, %v1086
      %v1088 = vrot.slane %v410, 1
      %v1089 = vsel %vm1062, %v1086, %v1088
      %v1090 = vrot.slane %v411, 1
      %v1091 = vsel %vm1062, %v1088, %v1090
      %v1092 = vrot.slane %v412, 1
      %v1093 = vsel %vm1062, %v1090, %v1092
      %v1094 = vrot.slane %v413, 1
      %v1095 = vsel %vm1062, %v1092, %v1094
      %v1096 = vrot.slane %v414, 1
      %v1097 = vsel %vm1062, %v1094, %v1096
      %v1132 = vunpack.c.l.b16 %v1046
      %v1133 = vunpack.c.l.b16 %v1047
      %v1134 = vunpack.c.l.b16 %v1048
      %v1135 = vunpack.c.l.b16 %v1049
      %v1136 = vunpack.c.l.b16 %v1050
      %v1137 = vunpack.c.l.b16 %v1051
      %v1138 = vunpack.c.l.b16 %v1052
      %v1139 = vunpack.c.l.b16 %v1053
      %v1140 = vunpack.c.l.b16 %v1054
      %v1141 = vunpack.c.l.b16 %v1055
      %v1142 = vunpack.c.l.b16 %v1056
      %v1143 = vunpack.c.l.b16 %v1057
      %v1144 = vunpack.c.l.b16 %v1058
      %v1145 = vunpack.c.l.b16 %v1059
      %v1146 = vunpack.c.l.b16 %v1060
      %v1147 = vunpack.c.l.b16 %v1061
      %v1148 = vpack.c.b16 %v1133, %v1132
      %v1149 = vpack.c.b16 %v1135, %v1134
      %v1150 = vpack.c.b16 %v1137, %v1136
      %v1151 = vpack.c.b16 %v1139, %v1138
      %v1152 = vpack.c.b16 %v1141, %v1140
      %v1153 = vpack.c.b16 %v1143, %v1142
      %v1154 = vpack.c.b16 %v1145, %v1144
      %v1155 = vpack.c.b16 %v1147, %v1146
      %1164 = vmatprep.subr.bf16.mxu0 0
      %1165 = vmatpush1.bf16.msra.mxu0 %v1148
      %1166 = vmatprep.subr.bf16.mxu0 0
      %1167 = vmatpush1.bf16.msra.mxu0 %v1149
      %1168 = vmatprep.subr.bf16.mxu0 0
      %1169 = vmatpush1.bf16.msra.mxu0 %v1150
      %1170 = vmatprep.subr.bf16.mxu0 0
      %1171 = vmatpush1.bf16.msra.mxu0 %v1151
      %1172 = vmatprep.subr.bf16.mxu0 0
      %1173 = vmatpush1.bf16.msra.mxu0 %v1152
      %1174 = vmatprep.subr.bf16.mxu0 0
      %1175 = vmatpush1.bf16.msra.mxu0 %v1153
      %1176 = vmatprep.subr.bf16.mxu0 0
      %1177 = vmatpush1.bf16.msra.mxu0 %v1154
      %1178 = vmatprep.subr.bf16.mxu0 0
      %1179 = vmatpush1.bf16.msra.mxu0 %v1155
      %1180 = vmatprep.subr.bf16.mxu0 0
      %1181 = vmatpush1.bf16.msra.mxu0 0
      %1182 = vmatprep.subr.bf16.mxu0 0
      %1183 = vmatpush1.bf16.msra.mxu0 0
      %1184 = vmatprep.subr.bf16.mxu0 0
      %1185 = vmatpush1.bf16.msra.mxu0 0
      %1186 = vmatprep.subr.bf16.mxu0 0
      %1187 = vmatpush1.bf16.msra.mxu0 0
      %1188 = vmatprep.subr.bf16.mxu0 0
      %1189 = vmatpush1.bf16.msra.mxu0 0
      %1190 = vmatprep.subr.bf16.mxu0 0
      %1191 = vmatpush1.bf16.msra.mxu0 0
      %1192 = vmatprep.subr.bf16.mxu0 0
      %1193 = vmatpush1.bf16.msra.mxu0 0
      %1194 = vmatprep.subr.bf16.mxu0 0
      %1195 = vmatpush1.bf16.msra.mxu0 0
      %1196 = vmatprep.mubr.bf16.mxu0 0
      %1197 = vmatmul.mubr.bf16.gmra.mrb[0].mxu0 %v1065
      %v1198 = vpop.f32.mrb[0].mxu0
      %v1199 = vadd.f32 0.0, %v1198
      %v1200 = vpop.f32.mrb[0].mxu0
      %v1201 = vpop.f32.mrb[0].mxu0
      %v1202 = vadd.f32 0.0, %v1201
      %v1203 = vpop.f32.mrb[0].mxu0
      %1204 = vmatprep.mubr.bf16.mxu0 0
      %1205 = vmatmul.mubr.bf16.gmra.mrb[0].mxu0 %v1067
      %v1206 = vpop.f32.mrb[0].mxu0
      %v1207 = vadd.f32 0.0, %v1206
      %v1208 = vpop.f32.mrb[0].mxu0
      %v1209 = vpop.f32.mrb[0].mxu0
      %v1210 = vadd.f32 0.0, %v1209
      %v1211 = vpop.f32.mrb[0].mxu0
      %1212 = vmatprep.mubr.bf16.mxu0 0
      %1213 = vmatmul.mubr.bf16.gmra.mrb[0].mxu0 %v1069
      %v1214 = vpop.f32.mrb[0].mxu0
      %v1215 = vadd.f32 0.0, %v1214
      %v1216 = vpop.f32.mrb[0].mxu0
      %v1217 = vpop.f32.mrb[0].mxu0
      %v1218 = vadd.f32 0.0, %v1217
      %v1219 = vpop.f32.mrb[0].mxu0
      %1220 = vmatprep.mubr.bf16.mxu0 0
      %1221 = vmatmul.mubr.bf16.gmra.mrb[0].mxu0 %v1071
      %v1222 = vpop.f32.mrb[0].mxu0
      %v1223 = vadd.f32 0.0, %v1222
      %v1224 = vpop.f32.mrb[0].mxu0
      %v1225 = vpop.f32.mrb[0].mxu0
      %v1226 = vadd.f32 0.0, %v1225
      %v1227 = vpop.f32.mrb[0].mxu0
      %1228 = vmatprep.mubr.bf16.mxu0 0
      %1229 = vmatmul.mubr.bf16.gmra.mrb[0].mxu0 %v1073
      %v1230 = vpop.f32.mrb[0].mxu0
      %v1231 = vadd.f32 0.0, %v1230
      %v1232 = vpop.f32.mrb[0].mxu0
      %v1233 = vpop.f32.mrb[0].mxu0
      %v1234 = vadd.f32 0.0, %v1233
      %v1235 = vpop.f32.mrb[0].mxu0
      %1236 = vmatprep.mubr.bf16.mxu0 0
      %1237 = vmatmul.mubr.bf16.gmra.mrb[0].mxu0 %v1075
      %v1238 = vpop.f32.mrb[0].mxu0
      %v1239 = vadd.f32 0.0, %v1238
      %v1240 = vpop.f32.mrb[0].mxu0
      %v1241 = vpop.f32.mrb[0].mxu0
      %v1242 = vadd.f32 0.0, %v1241
      %v1243 = vpop.f32.mrb[0].mxu0
      %1244 = vmatprep.mubr.bf16.mxu0 0
      %1245 = vmatmul.mubr.bf16.gmra.mrb[0].mxu0 %v1077
      %v1246 = vpop.f32.mrb[0].mxu0
      %v1247 = vadd.f32 0.0, %v1246
      %v1248 = vpop.f32.mrb[0].mxu0
      %v1249 = vpop.f32.mrb[0].mxu0
      %v1250 = vadd.f32 0.0, %v1249
      %v1251 = vpop.f32.mrb[0].mxu0
      %1252 = vmatprep.mubr.bf16.mxu0 0
      %1253 = vmatmul.mubr.bf16.gmra.mrb[0].mxu0 %v1079
      %v1254 = vpop.f32.mrb[0].mxu0
      %v1255 = vadd.f32 0.0, %v1254
      %v1256 = vpop.f32.mrb[0].mxu0
      %v1257 = vpop.f32.mrb[0].mxu0
      %v1258 = vadd.f32 0.0, %v1257
      %v1259 = vpop.f32.mrb[0].mxu0
      %1260 = vmatprep.mubr.bf16.mxu0 0
      %1261 = vmatmul.mubr.bf16.gmra.mrb[0].mxu0 %v1081
      %v1262 = vpop.f32.mrb[0].mxu0
      %v1263 = vadd.f32 0.0, %v1262
      %v1264 = vpop.f32.mrb[0].mxu0
      %v1265 = vpop.f32.mrb[0].mxu0
      %v1266 = vadd.f32 0.0, %v1265
      %v1267 = vpop.f32.mrb[0].mxu0
      %1268 = vmatprep.mubr.bf16.mxu0 0
      %1269 = vmatmul.mubr.bf16.gmra.mrb[0].mxu0 %v1083
      %v1270 = vpop.f32.mrb[0].mxu0
      %v1271 = vadd.f32 0.0, %v1270
      %v1272 = vpop.f32.mrb[0].mxu0
      %v1273 = vpop.f32.mrb[0].mxu0
      %v1274 = vadd.f32 0.0, %v1273
      %v1275 = vpop.f32.mrb[0].mxu0
      %1276 = vmatprep.mubr.bf16.mxu0 0
      %1277 = vmatmul.mubr.bf16.gmra.mrb[0].mxu0 %v1085
      %v1278 = vpop.f32.mrb[0].mxu0
      %v1279 = vadd.f32 0.0, %v1278
      %v1280 = vpop.f32.mrb[0].mxu0
      %v1281 = vpop.f32.mrb[0].mxu0
      %v1282 = vadd.f32 0.0, %v1281
      %v1283 = vpop.f32.mrb[0].mxu0
      %1284 = vmatprep.mubr.bf16.mxu0 0
      %1285 = vmatmul.mubr.bf16.gmra.mrb[0].mxu0 %v1087
      %v1286 = vpop.f32.mrb[0].mxu0
      %v1287 = vadd.f32 0.0, %v1286
      %v1288 = vpop.f32.mrb[0].mxu0
      %v1289 = vpop.f32.mrb[0].mxu0
      %v1290 = vadd.f32 0.0, %v1289
      %v1291 = vpop.f32.mrb[0].mxu0
      %1292 = vmatprep.mubr.bf16.mxu0 0
      %1293 = vmatmul.mubr.bf16.gmra.mrb[0].mxu0 %v1089
      %v1294 = vpop.f32.mrb[0].mxu0
      %v1295 = vadd.f32 0.0, %v1294
      %v1296 = vpop.f32.mrb[0].mxu0
      %v1297 = vpop.f32.mrb[0].mxu0
      %v1298 = vadd.f32 0.0, %v1297
      %v1299 = vpop.f32.mrb[0].mxu0
      %1300 = vmatprep.mubr.bf16.mxu0 0
      %1301 = vmatmul.mubr.bf16.gmra.mrb[0].mxu0 %v1091
      %v1302 = vpop.f32.mrb[0].mxu0
      %v1303 = vadd.f32 0.0, %v1302
      %v1304 = vpop.f32.mrb[0].mxu0
      %v1305 = vpop.f32.mrb[0].mxu0
      %v1306 = vadd.f32 0.0, %v1305
      %v1307 = vpop.f32.mrb[0].mxu0
      %1308 = vmatprep.mubr.bf16.mxu0 0
      %1309 = vmatmul.mubr.bf16.gmra.mrb[0].mxu0 %v1093
      %v1310 = vpop.f32.mrb[0].mxu0
      %v1311 = vadd.f32 0.0, %v1310
      %v1312 = vpop.f32.mrb[0].mxu0
      %v1313 = vpop.f32.mrb[0].mxu0
      %v1314 = vadd.f32 0.0, %v1313
      %v1315 = vpop.f32.mrb[0].mxu0
      %1316 = vmatprep.mubr.bf16.mxu0 0
      %1317 = vmatmul.mubr.bf16.gmra.mrb[0].mxu0 %v1095
      %v1318 = vpop.f32.mrb[0].mxu0
      %v1319 = vadd.f32 0.0, %v1318
      %v1320 = vpop.f32.mrb[0].mxu0
      %v1321 = vpop.f32.mrb[0].mxu0
      %v1322 = vadd.f32 0.0, %v1321
      %v1323 = vpop.f32.mrb[0].mxu0
      %1324 = vmatprep.mubr.bf16.mxu0 0
      %1325 = vmatmul.mubr.bf16.gmra.mrb[0].mxu0 %v1097
      %v1326 = vpop.f32.mrb[0].mxu0
      %v1327 = vadd.f32 0.0, %v1326
      %v1328 = vpop.f32.mrb[0].mxu0
      %v1329 = vpop.f32.mrb[0].mxu0
      %v1330 = vadd.f32 0.0, %v1329
      %v1331 = vpop.f32.mrb[0].mxu0
      %1332 = vmatprep.mubr.bf16.mxu0 0
      %1333 = vmatmul.mubr.bf16.gmra.mrb[0].mxu0 %v1096
      %v1334 = vpop.f32.mrb[0].mxu0
      %v1335 = vadd.f32 0.0, %v1334
      %v1336 = vpop.f32.mrb[0].mxu0
      %v1337 = vpop.f32.mrb[0].mxu0
      %v1338 = vadd.f32 0.0, %v1337
      %v1339 = vpop.f32.mrb[0].mxu0
      %1340 = vdwg.mxu0
      %v1341 = vadd.f32 %v903, %v1199
      %v1342 = vadd.f32 %v906, %v1202
      %v1343 = vadd.f32 %v911, %v1207
      %v1344 = vadd.f32 %v914, %v1210
      %v1345 = vadd.f32 %v919, %v1215
      %v1346 = vadd.f32 %v922, %v1218
      %v1347 = vadd.f32 %v927, %v1223
      %v1348 = vadd.f32 %v930, %v1226
      %v1349 = vadd.f32 %v935, %v1231
      %v1350 = vadd.f32 %v938, %v1234
      %v1351 = vadd.f32 %v943, %v1239
      %v1352 = vadd.f32 %v946, %v1242
      %v1353 = vadd.f32 %v951, %v1247
      %v1354 = vadd.f32 %v954, %v1250
      %v1355 = vadd.f32 %v959, %v1255
      %v1356 = vadd.f32 %v962, %v1258
      %v1357 = vadd.f32 %v967, %v1263
      %v1358 = vadd.f32 %v970, %v1266
      %v1359 = vadd.f32 %v975, %v1271
      %v1360 = vadd.f32 %v978, %v1274
      %v1361 = vadd.f32 %v983, %v1279
      %v1362 = vadd.f32 %v986, %v1282
      %v1363 = vadd.f32 %v991, %v1287
      %v1364 = vadd.f32 %v994, %v1290
      %v1365 = vadd.f32 %v999, %v1295
      %v1366 = vadd.f32 %v1002, %v1298
      %v1367 = vadd.f32 %v1007, %v1303
      %v1368 = vadd.f32 %v1010, %v1306
      %v1369 = vadd.f32 %v1015, %v1311
      %v1370 = vadd.f32 %v1018, %v1314
      %v1371 = vadd.f32 %v1023, %v1319
      %v1372 = vadd.f32 %v1026, %v1322
      %v1373 = vadd.f32 %v1031, %v1327
      %v1374 = vadd.f32 %v1034, %v1330
      %v1375 = vadd.f32 %v1039, %v1335
      %v1376 = vadd.f32 %v1042, %v1338
      %v1377 = vld [vmem:[%s3] sm:$0x1]
      %v1379 = vlaneseq
      %v1380 = vshrl.u32 %v1379, 7
      %v1381 = vsub.s32 0, %v1380
      %v1382 = vrot.slane %v1377, %v1381
      %v1384 = vadd.f32 %v1341, %v1382
      %v1385 = vadd.f32 %v1342, %v1382
      %v1386 = vadd.f32 %v1343, %v1382
      %v1387 = vadd.f32 %v1344, %v1382
      %v1388 = vadd.f32 %v1345, %v1382
      %v1389 = vadd.f32 %v1346, %v1382
      %v1390 = vadd.f32 %v1347, %v1382
      %v1391 = vadd.f32 %v1348, %v1382
      %v1392 = vadd.f32 %v1349, %v1382
      %v1393 = vadd.f32 %v1350, %v1382
      %v1394 = vadd.f32 %v1351, %v1382
      %v1395 = vadd.f32 %v1352, %v1382
      %v1396 = vadd.f32 %v1353, %v1382
      %v1397 = vadd.f32 %v1354, %v1382
      %v1398 = vadd.f32 %v1355, %v1382
      %v1399 = vadd.f32 %v1356, %v1382
      %v1400 = vadd.f32 %v1357, %v1382
      %v1401 = vadd.f32 %v1358, %v1382
      %v1402 = vadd.f32 %v1359, %v1382
      %v1403 = vadd.f32 %v1360, %v1382
      %v1404 = vadd.f32 %v1361, %v1382
      %v1405 = vadd.f32 %v1362, %v1382
      %v1406 = vadd.f32 %v1363, %v1382
      %v1407 = vadd.f32 %v1364, %v1382
      %v1408 = vadd.f32 %v1365, %v1382
      %v1409 = vadd.f32 %v1366, %v1382
      %v1410 = vadd.f32 %v1367, %v1382
      %v1411 = vadd.f32 %v1368, %v1382
      %v1412 = vadd.f32 %v1369, %v1382
      %v1413 = vadd.f32 %v1370, %v1382
      %v1414 = vadd.f32 %v1371, %v1382
      %v1415 = vadd.f32 %v1372, %v1382
      %v1416 = vadd.f32 %v1373, %v1382
      %v1417 = vadd.f32 %v1374, %v1382
      %v1418 = vadd.f32 %v1375, %v1382
      %v1419 = vadd.f32 %v1376, %v1382
      %vm1420 = vcmp.ge.f32.partialorder %v1384, 0.0
      %vm1421 = vcmp.ge.f32.partialorder %v1385, 0.0
      %vm1422 = vcmp.ge.f32.partialorder %v1386, 0.0
      %vm1423 = vcmp.ge.f32.partialorder %v1387, 0.0
      %vm1424 = vcmp.ge.f32.partialorder %v1388, 0.0
      %vm1425 = vcmp.ge.f32.partialorder %v1389, 0.0
      %vm1426 = vcmp.ge.f32.partialorder %v1390, 0.0
      %vm1427 = vcmp.ge.f32.partialorder %v1391, 0.0
      %vm1428 = vcmp.ge.f32.partialorder %v1392, 0.0
      %vm1429 = vcmp.ge.f32.partialorder %v1393, 0.0
      %vm1430 = vcmp.ge.f32.partialorder %v1394, 0.0
      %vm1431 = vcmp.ge.f32.partialorder %v1395, 0.0
      %vm1432 = vcmp.ge.f32.partialorder %v1396, 0.0
      %vm1433 = vcmp.ge.f32.partialorder %v1397, 0.0
      %vm1434 = vcmp.ge.f32.partialorder %v1398, 0.0
      %vm1435 = vcmp.ge.f32.partialorder %v1399, 0.0
      %vm1436 = vcmp.ge.f32.partialorder %v1400, 0.0
      %vm1437 = vcmp.ge.f32.partialorder %v1401, 0.0
      %vm1438 = vcmp.ge.f32.partialorder %v1402, 0.0
      %vm1439 = vcmp.ge.f32.partialorder %v1403, 0.0
      %vm1440 = vcmp.ge.f32.partialorder %v1404, 0.0
      %vm1441 = vcmp.ge.f32.partialorder %v1405, 0.0
      %vm1442 = vcmp.ge.f32.partialorder %v1406, 0.0
      %vm1443 = vcmp.ge.f32.partialorder %v1407, 0.0
      %vm1444 = vcmp.ge.f32.partialorder %v1408, 0.0
      %vm1445 = vcmp.ge.f32.partialorder %v1409, 0.0
      %vm1446 = vcmp.ge.f32.partialorder %v1410, 0.0
      %vm1447 = vcmp.ge.f32.partialorder %v1411, 0.0
      %vm1448 = vcmp.ge.f32.partialorder %v1412, 0.0
      %vm1449 = vcmp.ge.f32.partialorder %v1413, 0.0
      %vm1450 = vcmp.ge.f32.partialorder %v1414, 0.0
      %vm1451 = vcmp.ge.f32.partialorder %v1415, 0.0
      %vm1452 = vcmp.ge.f32.partialorder %v1416, 0.0
      %vm1453 = vcmp.ge.f32.partialorder %v1417, 0.0
      %vm1454 = vcmp.ge.f32.partialorder %v1418, 0.0
      %vm1455 = vcmp.ge.f32.partialorder %v1419, 0.0
      %v1456 = vmul.f32 %v1384, 0.1
      %v1457 = vmul.f32 %v1385, 0.1
      %v1458 = vmul.f32 %v1386, 0.1
      %v1459 = vmul.f32 %v1387, 0.1
      %v1460 = vmul.f32 %v1388, 0.1
      %v1461 = vmul.f32 %v1389, 0.1
      %v1462 = vmul.f32 %v1390, 0.1
      %v1463 = vmul.f32 %v1391, 0.1
      %v1464 = vmul.f32 %v1392, 0.1
      %v1465 = vmul.f32 %v1393, 0.1
      %v1466 = vmul.f32 %v1394, 0.1
      %v1467 = vmul.f32 %v1395, 0.1
      %v1468 = vmul.f32 %v1396, 0.1
      %v1469 = vmul.f32 %v1397, 0.1
      %v1470 = vmul.f32 %v1398, 0.1
      %v1471 = vmul.f32 %v1399, 0.1
      %v1472 = vmul.f32 %v1400, 0.1
      %v1473 = vmul.f32 %v1401, 0.1
      %v1474 = vmul.f32 %v1402, 0.1
      %v1475 = vmul.f32 %v1403, 0.1
      %v1476 = vmul.f32 %v1404, 0.1
      %v1477 = vmul.f32 %v1405, 0.1
      %v1478 = vmul.f32 %v1406, 0.1
      %v1479 = vmul.f32 %v1407, 0.1
      %v1480 = vmul.f32 %v1408, 0.1
      %v1481 = vmul.f32 %v1409, 0.1
      %v1482 = vmul.f32 %v1410, 0.1
      %v1483 = vmul.f32 %v1411, 0.1
      %v1484 = vmul.f32 %v1412, 0.1
      %v1485 = vmul.f32 %v1413, 0.1
      %v1486 = vmul.f32 %v1414, 0.1
      %v1487 = vmul.f32 %v1415, 0.1
      %v1488 = vmul.f32 %v1416, 0.1
      %v1489 = vmul.f32 %v1417, 0.1
      %v1490 = vmul.f32 %v1418, 0.1
      %v1491 = vmul.f32 %v1419, 0.1
      %v1492 = vsel %vm1420, %v1384, %v1456
      %v1493 = vsel %vm1421, %v1385, %v1457
      %v1494 = vsel %vm1422, %v1386, %v1458
      %v1495 = vsel %vm1423, %v1387, %v1459
      %v1496 = vsel %vm1424, %v1388, %v1460
      %v1497 = vsel %vm1425, %v1389, %v1461
      %v1498 = vsel %vm1426, %v1390, %v1462
      %v1499 = vsel %vm1427, %v1391, %v1463
      %v1500 = vsel %vm1428, %v1392, %v1464
      %v1501 = vsel %vm1429, %v1393, %v1465
      %v1502 = vsel %vm1430, %v1394, %v1466
      %v1503 = vsel %vm1431, %v1395, %v1467
      %v1504 = vsel %vm1432, %v1396, %v1468
      %v1505 = vsel %vm1433, %v1397, %v1469
      %v1506 = vsel %vm1434, %v1398, %v1470
      %v1507 = vsel %vm1435, %v1399, %v1471
      %v1508 = vsel %vm1436, %v1400, %v1472
      %v1509 = vsel %vm1437, %v1401, %v1473
      %v1510 = vsel %vm1438, %v1402, %v1474
      %v1511 = vsel %vm1439, %v1403, %v1475
      %v1512 = vsel %vm1440, %v1404, %v1476
      %v1513 = vsel %vm1441, %v1405, %v1477
      %v1514 = vsel %vm1442, %v1406, %v1478
      %v1515 = vsel %vm1443, %v1407, %v1479
      %v1516 = vsel %vm1444, %v1408, %v1480
      %v1517 = vsel %vm1445, %v1409, %v1481
      %v1518 = vsel %vm1446, %v1410, %v1482
      %v1519 = vsel %vm1447, %v1411, %v1483
      %v1520 = vsel %vm1448, %v1412, %v1484
      %v1521 = vsel %vm1449, %v1413, %v1485
      %v1522 = vsel %vm1450, %v1414, %v1486
      %v1523 = vsel %vm1451, %v1415, %v1487
      %v1524 = vsel %vm1452, %v1416, %v1488
      %v1525 = vsel %vm1453, %v1417, %v1489
      %v1526 = vsel %vm1454, %v1418, %v1490
      %v1527 = vsel %vm1455, %v1419, %v1491
      %v1528 = vld [vmem:[%s1 + $0x1] sm:$0xff]
      %v1529 = vld [vmem:[%s1 + $0x9] sm:$0xff]
      %v1530 = vld [vmem:[%s1 + $0x11] sm:$0xff]
      %v1531 = vld [vmem:[%s1 + $0x19] sm:$0xff]
      %v1532 = vld [vmem:[%s1 + $0x21] sm:$0xff]
      %v1533 = vld [vmem:[%s1 + $0x29] sm:$0xff]
      %v1534 = vld [vmem:[%s1 + $0x31] sm:$0xff]
      %v1535 = vld [vmem:[%s1 + $0x39] sm:$0xff]
      %v1536 = vld [vmem:[%s1 + $0x41] sm:$0xff]
      %v1537 = vld [vmem:[%s1 + $0x49] sm:$0xff]
      %v1538 = vld [vmem:[%s1 + $0x51] sm:$0xff]
      %v1539 = vld [vmem:[%s1 + $0x59] sm:$0xff]
      %v1540 = vld [vmem:[%s1 + $0x61] sm:$0xff]
      %v1541 = vld [vmem:[%s1 + $0x69] sm:$0xff]
      %v1542 = vld [vmem:[%s1 + $0x71] sm:$0xff]
      %v1543 = vld [vmem:[%s1 + $0x79] sm:$0xff]
      %v1544 = vld [vmem:[%s1 + $0x81] sm:$0xff]
      %v1545 = vld [vmem:[%s1 + $0x89] sm:$0xff]
      %v1546 = vld [vmem:[%s1 + $0x91] sm:$0xff]
      %v1547 = vld [vmem:[%s1 + $0x99] sm:$0xff]
      %v1548 = vld [vmem:[%s1 + $0xa1] sm:$0xff]
      %v1549 = vld [vmem:[%s1 + $0xa9] sm:$0xff]
      %v1550 = vld [vmem:[%s1 + $0xb1] sm:$0xff]
      %v1551 = vld [vmem:[%s1 + $0xb9] sm:$0xff]
      %v1552 = vld [vmem:[%s1 + $0xc1] sm:$0xff]
      %v1553 = vld [vmem:[%s1 + $0xc9] sm:$0xff]
      %v1554 = vld [vmem:[%s1 + $0xd1] sm:$0xff]
      %v1555 = vld [vmem:[%s1 + $0xd9] sm:$0xff]
      %v1556 = vld [vmem:[%s1 + $0xe1] sm:$0xff]
      %v1557 = vld [vmem:[%s1 + $0xe9] sm:$0xff]
      %v1558 = vld [vmem:[%s1 + $0xf1] sm:$0xff]
      %v1559 = vld [vmem:[%s1 + $0xf9] sm:$0xff]
      %v1560 = vld [vmem:[%s1 + $0x101] sm:$0xff]
      %v1561 = vld [vmem:[%s1 + $0x109] sm:$0xff]
      %v1562 = vld [vmem:[%s1 + $0x111] sm:$0xff]
      %v1563 = vld [vmem:[%s1 + $0x119] sm:$0x3f]
      %1565 = vset.pattern.permute.xlu0 0
      %1566 = vperm.xlu0 %1565, %v1528
      %v1567 = vpop.permute.xlu0 %1566
      %1570 = vset.pattern.permute.xlu0 0
      %1571 = vperm.xlu0 %1570, %v1529
      %v1572 = vpop.permute.xlu0 %1571
      %1575 = vset.pattern.permute.xlu0 0
      %1576 = vperm.xlu0 %1575, %v1530
      %v1577 = vpop.permute.xlu0 %1576
      %1580 = vset.pattern.permute.xlu0 0
      %1581 = vperm.xlu0 %1580, %v1531
      %v1582 = vpop.permute.xlu0 %1581
      %1585 = vset.pattern.permute.xlu0 0
      %1586 = vperm.xlu0 %1585, %v1532
      %v1587 = vpop.permute.xlu0 %1586
      %1590 = vset.pattern.permute.xlu0 0
      %1591 = vperm.xlu0 %1590, %v1533
      %v1592 = vpop.permute.xlu0 %1591
      %1595 = vset.pattern.permute.xlu0 0
      %1596 = vperm.xlu0 %1595, %v1534
      %v1597 = vpop.permute.xlu0 %1596
      %1600 = vset.pattern.permute.xlu0 0
      %1601 = vperm.xlu0 %1600, %v1535
      %v1602 = vpop.permute.xlu0 %1601
      %1605 = vset.pattern.permute.xlu0 0
      %1606 = vperm.xlu0 %1605, %v1536
      %v1607 = vpop.permute.xlu0 %1606
      %1610 = vset.pattern.permute.xlu0 0
      %1611 = vperm.xlu0 %1610, %v1537
      %v1612 = vpop.permute.xlu0 %1611
      %1615 = vset.pattern.permute.xlu0 0
      %1616 = vperm.xlu0 %1615, %v1538
      %v1617 = vpop.permute.xlu0 %1616
      %1620 = vset.pattern.permute.xlu0 0
      %1621 = vperm.xlu0 %1620, %v1539
      %v1622 = vpop.permute.xlu0 %1621
      %1625 = vset.pattern.permute.xlu0 0
      %1626 = vperm.xlu0 %1625, %v1540
      %v1627 = vpop.permute.xlu0 %1626
      %1630 = vset.pattern.permute.xlu0 0
      %1631 = vperm.xlu0 %1630, %v1541
      %v1632 = vpop.permute.xlu0 %1631
      %1635 = vset.pattern.permute.xlu0 0
      %1636 = vperm.xlu0 %1635, %v1542
      %v1637 = vpop.permute.xlu0 %1636
      %1640 = vset.pattern.permute.xlu0 0
      %1641 = vperm.xlu0 %1640, %v1543
      %v1642 = vpop.permute.xlu0 %1641
      %1645 = vset.pattern.permute.xlu0 0
      %1646 = vperm.xlu0 %1645, %v1544
      %v1647 = vpop.permute.xlu0 %1646
      %1650 = vset.pattern.permute.xlu0 0
      %1651 = vperm.xlu0 %1650, %v1545
      %v1652 = vpop.permute.xlu0 %1651
      %1655 = vset.pattern.permute.xlu0 0
      %1656 = vperm.xlu0 %1655, %v1546
      %v1657 = vpop.permute.xlu0 %1656
      %1660 = vset.pattern.permute.xlu0 0
      %1661 = vperm.xlu0 %1660, %v1547
      %v1662 = vpop.permute.xlu0 %1661
      %1665 = vset.pattern.permute.xlu0 0
      %1666 = vperm.xlu0 %1665, %v1548
      %v1667 = vpop.permute.xlu0 %1666
      %1670 = vset.pattern.permute.xlu0 0
      %1671 = vperm.xlu0 %1670, %v1549
      %v1672 = vpop.permute.xlu0 %1671
      %1675 = vset.pattern.permute.xlu0 0
      %1676 = vperm.xlu0 %1675, %v1550
      %v1677 = vpop.permute.xlu0 %1676
      %1680 = vset.pattern.permute.xlu0 0
      %1681 = vperm.xlu0 %1680, %v1551
      %v1682 = vpop.permute.xlu0 %1681
      %1685 = vset.pattern.permute.xlu0 0
      %1686 = vperm.xlu0 %1685, %v1552
      %v1687 = vpop.permute.xlu0 %1686
      %1690 = vset.pattern.permute.xlu0 0
      %1691 = vperm.xlu0 %1690, %v1553
      %v1692 = vpop.permute.xlu0 %1691
      %1695 = vset.pattern.permute.xlu0 0
      %1696 = vperm.xlu0 %1695, %v1554
      %v1697 = vpop.permute.xlu0 %1696
      %1700 = vset.pattern.permute.xlu0 0
      %1701 = vperm.xlu0 %1700, %v1555
      %v1702 = vpop.permute.xlu0 %1701
      %1705 = vset.pattern.permute.xlu0 0
      %1706 = vperm.xlu0 %1705, %v1556
      %v1707 = vpop.permute.xlu0 %1706
      %1710 = vset.pattern.permute.xlu0 0
      %1711 = vperm.xlu0 %1710, %v1557
      %v1712 = vpop.permute.xlu0 %1711
      %1715 = vset.pattern.permute.xlu0 0
      %1716 = vperm.xlu0 %1715, %v1558
      %v1717 = vpop.permute.xlu0 %1716
      %1720 = vset.pattern.permute.xlu0 0
      %1721 = vperm.xlu0 %1720, %v1559
      %v1722 = vpop.permute.xlu0 %1721
      %1725 = vset.pattern.permute.xlu0 0
      %1726 = vperm.xlu0 %1725, %v1560
      %v1727 = vpop.permute.xlu0 %1726
      %1730 = vset.pattern.permute.xlu0 0
      %1731 = vperm.xlu0 %1730, %v1561
      %v1732 = vpop.permute.xlu0 %1731
      %1735 = vset.pattern.permute.xlu0 0
      %1736 = vperm.xlu0 %1735, %v1562
      %v1737 = vpop.permute.xlu0 %1736
      %1740 = vset.pattern.permute.xlu0 0
      %1741 = vperm.xlu0 %1740, %v1563
      %v1742 = vpop.permute.xlu0 %1741
      %v1744 = vmul.f32 %v1492, %v1567
      %v1745 = vmul.f32 %v1493, %v1572
      %v1746 = vmul.f32 %v1494, %v1577
      %v1747 = vmul.f32 %v1495, %v1582
      %v1748 = vmul.f32 %v1496, %v1587
      %v1749 = vmul.f32 %v1497, %v1592
      %v1750 = vmul.f32 %v1498, %v1597
      %v1751 = vmul.f32 %v1499, %v1602
      %v1752 = vmul.f32 %v1500, %v1607
      %v1753 = vmul.f32 %v1501, %v1612
      %v1754 = vmul.f32 %v1502, %v1617
      %v1755 = vmul.f32 %v1503, %v1622
      %v1756 = vmul.f32 %v1504, %v1627
      %v1757 = vmul.f32 %v1505, %v1632
      %v1758 = vmul.f32 %v1506, %v1637
      %v1759 = vmul.f32 %v1507, %v1642
      %v1760 = vmul.f32 %v1508, %v1647
      %v1761 = vmul.f32 %v1509, %v1652
      %v1762 = vmul.f32 %v1510, %v1657
      %v1763 = vmul.f32 %v1511, %v1662
      %v1764 = vmul.f32 %v1512, %v1667
      %v1765 = vmul.f32 %v1513, %v1672
      %v1766 = vmul.f32 %v1514, %v1677
      %v1767 = vmul.f32 %v1515, %v1682
      %v1768 = vmul.f32 %v1516, %v1687
      %v1769 = vmul.f32 %v1517, %v1692
      %v1770 = vmul.f32 %v1518, %v1697
      %v1771 = vmul.f32 %v1519, %v1702
      %v1772 = vmul.f32 %v1520, %v1707
      %v1773 = vmul.f32 %v1521, %v1712
      %v1774 = vmul.f32 %v1522, %v1717
      %v1775 = vmul.f32 %v1523, %v1722
      %v1776 = vmul.f32 %v1524, %v1727
      %v1777 = vmul.f32 %v1525, %v1732
      %v1778 = vmul.f32 %v1526, %v1737
      %v1779 = vmul.f32 %v1527, %v1742
      %1780 = vst [vmem:[#allocation2] sm:$0x1] 0.0
      %1781 = vst [vmem:[#allocation2 + $0x11f] sm:$0x1] 0.0
      %1782 = vst [vmem:[#allocation2 + $0x1] sm:$0xff] %v1744
      %1783 = vst [vmem:[#allocation2 + $0x9] sm:$0xff] %v1745
      %1784 = vst [vmem:[#allocation2 + $0x11] sm:$0xff] %v1746
      %1785 = vst [vmem:[#allocation2 + $0x19] sm:$0xff] %v1747
      %1786 = vst [vmem:[#allocation2 + $0x21] sm:$0xff] %v1748
      %1787 = vst [vmem:[#allocation2 + $0x29] sm:$0xff] %v1749
      %1788 = vst [vmem:[#allocation2 + $0x31] sm:$0xff] %v1750
      %1789 = vst [vmem:[#allocation2 + $0x39] sm:$0xff] %v1751
      %1790 = vst [vmem:[#allocation2 + $0x41] sm:$0xff] %v1752
      %1791 = vst [vmem:[#allocation2 + $0x49] sm:$0xff] %v1753
      %1792 = vst [vmem:[#allocation2 + $0x51] sm:$0xff] %v1754
      %1793 = vst [vmem:[#allocation2 + $0x59] sm:$0xff] %v1755
      %1794 = vst [vmem:[#allocation2 + $0x61] sm:$0xff] %v1756
      %1795 = vst [vmem:[#allocation2 + $0x69] sm:$0xff] %v1757
      %1796 = vst [vmem:[#allocation2 + $0x71] sm:$0xff] %v1758
      %1797 = vst [vmem:[#allocation2 + $0x79] sm:$0xff] %v1759
      %1798 = vst [vmem:[#allocation2 + $0x81] sm:$0xff] %v1760
      %1799 = vst [vmem:[#allocation2 + $0x89] sm:$0xff] %v1761
      %1800 = vst [vmem:[#allocation2 + $0x91] sm:$0xff] %v1762
      %1801 = vst [vmem:[#allocation2 + $0x99] sm:$0xff] %v1763
      %1802 = vst [vmem:[#allocation2 + $0xa1] sm:$0xff] %v1764
      %1803 = vst [vmem:[#allocation2 + $0xa9] sm:$0xff] %v1765
      %1804 = vst [vmem:[#allocation2 + $0xb1] sm:$0xff] %v1766
      %1805 = vst [vmem:[#allocation2 + $0xb9] sm:$0xff] %v1767
      %1806 = vst [vmem:[#allocation2 + $0xc1] sm:$0xff] %v1768
      %1807 = vst [vmem:[#allocation2 + $0xc9] sm:$0xff] %v1769
      %1808 = vst [vmem:[#allocation2 + $0xd1] sm:$0xff] %v1770
      %1809 = vst [vmem:[#allocation2 + $0xd9] sm:$0xff] %v1771
      %1810 = vst [vmem:[#allocation2 + $0xe1] sm:$0xff] %v1772
      %1811 = vst [vmem:[#allocation2 + $0xe9] sm:$0xff] %v1773
      %1812 = vst [vmem:[#allocation2 + $0xf1] sm:$0xff] %v1774
      %1813 = vst [vmem:[#allocation2 + $0xf9] sm:$0xff] %v1775
      %1814 = vst [vmem:[#allocation2 + $0x101] sm:$0xff] %v1776
      %1815 = vst [vmem:[#allocation2 + $0x109] sm:$0xff] %v1777
      %1816 = vst [vmem:[#allocation2 + $0x111] sm:$0xff] %v1778
      %1817 = vst [vmem:[#allocation2 + $0x119] sm:$0x3f] %v1779
      %v1818 = vld [vmem:[#allocation2] sm:$0xff]
      %v1819 = vld [vmem:[#allocation2 + $0x8] sm:$0xff]
      %v1820 = vld [vmem:[#allocation2 + $0x10] sm:$0xff]
      %v1821 = vld [vmem:[#allocation2 + $0x18] sm:$0xff]
      %v1822 = vld [vmem:[#allocation2 + $0x20] sm:$0xff]
      %v1823 = vld [vmem:[#allocation2 + $0x28] sm:$0xff]
      %v1824 = vld [vmem:[#allocation2 + $0x30] sm:$0xff]
      %v1825 = vld [vmem:[#allocation2 + $0x38] sm:$0xff]
      %v1826 = vld [vmem:[#allocation2 + $0x40] sm:$0xff]
      %v1827 = vld [vmem:[#allocation2 + $0x48] sm:$0xff]
      %v1828 = vld [vmem:[#allocation2 + $0x50] sm:$0xff]
      %v1829 = vld [vmem:[#allocation2 + $0x58] sm:$0xff]
      %v1830 = vld [vmem:[#allocation2 + $0x60] sm:$0xff]
      %v1831 = vld [vmem:[#allocation2 + $0x68] sm:$0xff]
      %v1832 = vld [vmem:[#allocation2 + $0x70] sm:$0xff]
      %v1833 = vld [vmem:[#allocation2 + $0x78] sm:$0xff]
      %v1834 = vld [vmem:[#allocation2 + $0x80] sm:$0xff]
      %v1835 = vld [vmem:[#allocation2 + $0x88] sm:$0xff]
      %v1836 = vld [vmem:[#allocation2 + $0x90] sm:$0xff]
      %v1837 = vld [vmem:[#allocation2 + $0x98] sm:$0xff]
      %v1838 = vld [vmem:[#allocation2 + $0xa0] sm:$0xff]
      %v1839 = vld [vmem:[#allocation2 + $0xa8] sm:$0xff]
      %v1840 = vld [vmem:[#allocation2 + $0xb0] sm:$0xff]
      %v1841 = vld [vmem:[#allocation2 + $0xb8] sm:$0xff]
      %v1842 = vld [vmem:[#allocation2 + $0xc0] sm:$0xff]
      %v1843 = vld [vmem:[#allocation2 + $0xc8] sm:$0xff]
      %v1844 = vld [vmem:[#allocation2 + $0xd0] sm:$0xff]
      %v1845 = vld [vmem:[#allocation2 + $0xd8] sm:$0xff]
      %v1846 = vld [vmem:[#allocation2 + $0xe0] sm:$0xff]
      %v1847 = vld [vmem:[#allocation2 + $0xe8] sm:$0xff]
      %v1848 = vld [vmem:[#allocation2 + $0xf0] sm:$0xff]
      %v1849 = vld [vmem:[#allocation2 + $0xf8] sm:$0xff]
      %v1850 = vld [vmem:[#allocation2 + $0x100] sm:$0xff]
      %v1851 = vld [vmem:[#allocation2 + $0x108] sm:$0xff]
      %v1852 = vld [vmem:[#allocation2 + $0x110] sm:$0xff]
      %v1853 = vld [vmem:[#allocation2 + $0x118] sm:$0xff]
      %v1854 = vpack.c.bf16 %v1819, %v1818
      %v1855 = vpack.c.bf16 %v1821, %v1820
      %v1856 = vpack.c.bf16 %v1823, %v1822
      %v1857 = vpack.c.bf16 %v1825, %v1824
      %v1858 = vpack.c.bf16 %v1827, %v1826
      %v1859 = vpack.c.bf16 %v1829, %v1828
      %v1860 = vpack.c.bf16 %v1831, %v1830
      %v1861 = vpack.c.bf16 %v1833, %v1832
      %v1862 = vpack.c.bf16 %v1835, %v1834
      %v1863 = vpack.c.bf16 %v1837, %v1836
      %v1864 = vpack.c.bf16 %v1839, %v1838
      %v1865 = vpack.c.bf16 %v1841, %v1840
      %v1866 = vpack.c.bf16 %v1843, %v1842
      %v1867 = vpack.c.bf16 %v1845, %v1844
      %v1868 = vpack.c.bf16 %v1847, %v1846
      %v1869 = vpack.c.bf16 %v1849, %v1848
      %v1870 = vpack.c.bf16 %v1851, %v1850
      %v1871 = vpack.c.bf16 %v1853, %v1852
      %v1872 = vld [vmem:[%s4] sm:$0xf]
      %v1873 = vld [vmem:[%s4 + $0x4] sm:$0xf]
      %v1874 = vld [vmem:[%s4 + $0x8] sm:$0xf]
      %v1875 = vld [vmem:[%s4 + $0xc] sm:$0xf]
      %v1876 = vld [vmem:[%s4 + $0x10] sm:$0xf]
      %v1877 = vld [vmem:[%s4 + $0x14] sm:$0xf]
      %v1878 = vld [vmem:[%s4 + $0x18] sm:$0xf]
      %v1879 = vld [vmem:[%s4 + $0x1c] sm:$0xf]
      %v1880 = vld [vmem:[%s4 + $0x20] sm:$0xf]
      %v1881 = vld [vmem:[%s4 + $0x24] sm:$0xf]
      %v1882 = vld [vmem:[%s4 + $0x28] sm:$0xf]
      %v1883 = vld [vmem:[%s4 + $0x2c] sm:$0xf]
      %v1884 = vld [vmem:[%s4 + $0x30] sm:$0xf]
      %v1885 = vld [vmem:[%s4 + $0x34] sm:$0xf]
      %v1886 = vld [vmem:[%s4 + $0x38] sm:$0xf]
      %v1887 = vld [vmem:[%s4 + $0x3c] sm:$0xf]
      %s1888 = scalar_lea.vmem %s4, 64
      %v1889 = vld [vmem:[%s1888] sm:$0xf]
      %v1890 = vld [vmem:[%s1888 + $0x4] sm:$0xf]
      %v1891 = vld [vmem:[%s1888 + $0x8] sm:$0xf]
      %v1892 = vld [vmem:[%s1888 + $0xc] sm:$0xf]
      %v1893 = vld [vmem:[%s1888 + $0x10] sm:$0xf]
      %v1894 = vld [vmem:[%s1888 + $0x14] sm:$0xf]
      %v1895 = vld [vmem:[%s1888 + $0x18] sm:$0xf]
      %v1896 = vld [vmem:[%s1888 + $0x1c] sm:$0xf]
      %v1897 = vld [vmem:[%s1888 + $0x20] sm:$0xf]
      %v1898 = vld [vmem:[%s1888 + $0x24] sm:$0xf]
      %v1899 = vld [vmem:[%s1888 + $0x28] sm:$0xf]
      %v1900 = vld [vmem:[%s1888 + $0x2c] sm:$0xf]
      %v1901 = vld [vmem:[%s1888 + $0x30] sm:$0xf]
      %v1902 = vld [vmem:[%s1888 + $0x34] sm:$0xf]
      %v1903 = vld [vmem:[%s1888 + $0x38] sm:$0xf]
      %v1904 = vld [vmem:[%s1888 + $0x3c] sm:$0xf]
      %v1906 = vshrl.u32 %v1854, 16
      %v1908 = vshll.u32 %v1854, 16
      %v1910 = vrot.slane %v1908, 1
      %v1911 = vor.u32 %v1906, %v1910
      %v1913 = vshll.u32 %v1855, 16
      %v1915 = vrot.slane %v1913, 1
      %v1916 = vsel %vm415, %v1911, %v1915
      %v1917 = vshrl.u32 %v1855, 16
      %v1919 = vor.u32 %v1917, %v1915
      %v1921 = vshll.u32 %v1856, 16
      %v1923 = vrot.slane %v1921, 1
      %v1924 = vsel %vm415, %v1919, %v1923
      %v1925 = vshrl.u32 %v1856, 16
      %v1927 = vor.u32 %v1925, %v1923
      %v1929 = vshll.u32 %v1857, 16
      %v1931 = vrot.slane %v1929, 1
      %v1932 = vsel %vm415, %v1927, %v1931
      %v1933 = vshrl.u32 %v1857, 16
      %v1935 = vor.u32 %v1933, %v1931
      %v1937 = vshll.u32 %v1858, 16
      %v1939 = vrot.slane %v1937, 1
      %v1940 = vsel %vm415, %v1935, %v1939
      %v1941 = vshrl.u32 %v1858, 16
      %v1943 = vor.u32 %v1941, %v1939
      %v1945 = vshll.u32 %v1859, 16
      %v1947 = vrot.slane %v1945, 1
      %v1948 = vsel %vm415, %v1943, %v1947
      %v1949 = vshrl.u32 %v1859, 16
      %v1951 = vor.u32 %v1949, %v1947
      %v1953 = vshll.u32 %v1860, 16
      %v1955 = vrot.slane %v1953, 1
      %v1956 = vsel %vm415, %v1951, %v1955
      %v1957 = vshrl.u32 %v1860, 16
      %v1959 = vor.u32 %v1957, %v1955
      %v1961 = vshll.u32 %v1861, 16
      %v1963 = vrot.slane %v1961, 1
      %v1964 = vsel %vm415, %v1959, %v1963
      %v1965 = vshrl.u32 %v1861, 16
      %v1967 = vor.u32 %v1965, %v1963
      %v1969 = vshll.u32 %v1862, 16
      %v1971 = vrot.slane %v1969, 1
      %v1972 = vsel %vm415, %v1967, %v1971
      %v1973 = vshrl.u32 %v1862, 16
      %v1975 = vor.u32 %v1973, %v1971
      %v1977 = vshll.u32 %v1863, 16
      %v1979 = vrot.slane %v1977, 1
      %v1980 = vsel %vm415, %v1975, %v1979
      %v1981 = vshrl.u32 %v1863, 16
      %v1983 = vor.u32 %v1981, %v1979
      %v1985 = vshll.u32 %v1864, 16
      %v1987 = vrot.slane %v1985, 1
      %v1988 = vsel %vm415, %v1983, %v1987
      %v1989 = vshrl.u32 %v1864, 16
      %v1991 = vor.u32 %v1989, %v1987
      %v1993 = vshll.u32 %v1865, 16
      %v1995 = vrot.slane %v1993, 1
      %v1996 = vsel %vm415, %v1991, %v1995
      %v1997 = vshrl.u32 %v1865, 16
      %v1999 = vor.u32 %v1997, %v1995
      %v2001 = vshll.u32 %v1866, 16
      %v2003 = vrot.slane %v2001, 1
      %v2004 = vsel %vm415, %v1999, %v2003
      %v2005 = vshrl.u32 %v1866, 16
      %v2007 = vor.u32 %v2005, %v2003
      %v2009 = vshll.u32 %v1867, 16
      %v2011 = vrot.slane %v2009, 1
      %v2012 = vsel %vm415, %v2007, %v2011
      %v2013 = vshrl.u32 %v1867, 16
      %v2015 = vor.u32 %v2013, %v2011
      %v2017 = vshll.u32 %v1868, 16
      %v2019 = vrot.slane %v2017, 1
      %v2020 = vsel %vm415, %v2015, %v2019
      %v2021 = vshrl.u32 %v1868, 16
      %v2023 = vor.u32 %v2021, %v2019
      %v2025 = vshll.u32 %v1869, 16
      %v2027 = vrot.slane %v2025, 1
      %v2028 = vsel %vm415, %v2023, %v2027
      %v2029 = vshrl.u32 %v1869, 16
      %v2031 = vor.u32 %v2029, %v2027
      %v2033 = vshll.u32 %v1870, 16
      %v2035 = vrot.slane %v2033, 1
      %v2036 = vsel %vm415, %v2031, %v2035
      %v2037 = vshrl.u32 %v1870, 16
      %v2039 = vor.u32 %v2037, %v2035
      %v2041 = vshll.u32 %v1871, 16
      %v2043 = vrot.slane %v2041, 1
      %v2044 = vsel %vm415, %v2039, %v2043
      %v2045 = vshrl.u32 %v1871, 16
      %v2047 = vor.u32 %v2045, %v2043
      %v2082 = vunpack.c.l.b16 %v1889
      %v2083 = vunpack.c.l.b16 %v1890
      %v2084 = vunpack.c.l.b16 %v1891
      %v2085 = vunpack.c.l.b16 %v1892
      %v2086 = vunpack.c.l.b16 %v1893
      %v2087 = vunpack.c.l.b16 %v1894
      %v2088 = vunpack.c.l.b16 %v1895
      %v2089 = vunpack.c.l.b16 %v1896
      %v2090 = vunpack.c.l.b16 %v1897
      %v2091 = vunpack.c.l.b16 %v1898
      %v2092 = vunpack.c.l.b16 %v1899
      %v2093 = vunpack.c.l.b16 %v1900
      %v2094 = vunpack.c.l.b16 %v1901
      %v2095 = vunpack.c.l.b16 %v1902
      %v2096 = vunpack.c.l.b16 %v1903
      %v2097 = vunpack.c.l.b16 %v1904
      %v2098 = vpack.c.b16 %v2083, %v2082
      %v2099 = vpack.c.b16 %v2085, %v2084
      %v2100 = vpack.c.b16 %v2087, %v2086
      %v2101 = vpack.c.b16 %v2089, %v2088
      %v2102 = vpack.c.b16 %v2091, %v2090
      %v2103 = vpack.c.b16 %v2093, %v2092
      %v2104 = vpack.c.b16 %v2095, %v2094
      %v2105 = vpack.c.b16 %v2097, %v2096
      %2114 = vmatprep.subr.bf16.mxu0 0
      %2115 = vmatpush1.bf16.msra.mxu0 %v2098
      %2116 = vmatprep.subr.bf16.mxu0 0
      %2117 = vmatpush1.bf16.msra.mxu0 %v2099
      %2118 = vmatprep.subr.bf16.mxu0 0
      %2119 = vmatpush1.bf16.msra.mxu0 %v2100
      %2120 = vmatprep.subr.bf16.mxu0 0
      %2121 = vmatpush1.bf16.msra.mxu0 %v2101
      %2122 = vmatprep.subr.bf16.mxu0 0
      %2123 = vmatpush1.bf16.msra.mxu0 %v2102
      %2124 = vmatprep.subr.bf16.mxu0 0
      %2125 = vmatpush1.bf16.msra.mxu0 %v2103
      %2126 = vmatprep.subr.bf16.mxu0 0
      %2127 = vmatpush1.bf16.msra.mxu0 %v2104
      %2128 = vmatprep.subr.bf16.mxu0 0
      %2129 = vmatpush1.bf16.msra.mxu0 %v2105
      %2130 = vmatprep.subr.bf16.mxu0 0
      %2131 = vmatpush1.bf16.msra.mxu0 0
      %2132 = vmatprep.subr.bf16.mxu0 0
      %2133 = vmatpush1.bf16.msra.mxu0 0
      %2134 = vmatprep.subr.bf16.mxu0 0
      %2135 = vmatpush1.bf16.msra.mxu0 0
      %2136 = vmatprep.subr.bf16.mxu0 0
      %2137 = vmatpush1.bf16.msra.mxu0 0
      %2138 = vmatprep.subr.bf16.mxu0 0
      %2139 = vmatpush1.bf16.msra.mxu0 0
      %2140 = vmatprep.subr.bf16.mxu0 0
      %2141 = vmatpush1.bf16.msra.mxu0 0
      %2142 = vmatprep.subr.bf16.mxu0 0
      %2143 = vmatpush1.bf16.msra.mxu0 0
      %2144 = vmatprep.subr.bf16.mxu0 0
      %2145 = vmatpush1.bf16.msra.mxu0 0
      %2146 = vmatprep.mubr.bf16.mxu0 0
      %2147 = vmatmul.mubr.bf16.gmra.mrb[0].mxu0 %v1916
      %v2148 = vpop.f32.mrb[0].mxu0
      %v2149 = vadd.f32 0.0, %v2148
      %v2150 = vpop.f32.mrb[0].mxu0
      %v2151 = vpop.f32.mrb[0].mxu0
      %v2152 = vadd.f32 0.0, %v2151
      %v2153 = vpop.f32.mrb[0].mxu0
      %2154 = vmatprep.mubr.bf16.mxu0 0
      %2155 = vmatmul.mubr.bf16.gmra.mrb[0].mxu0 %v1924
      %v2156 = vpop.f32.mrb[0].mxu0
      %v2157 = vadd.f32 0.0, %v2156
      %v2158 = vpop.f32.mrb[0].mxu0
      %v2159 = vpop.f32.mrb[0].mxu0
      %v2160 = vadd.f32 0.0, %v2159
      %v2161 = vpop.f32.mrb[0].mxu0
      %2162 = vmatprep.mubr.bf16.mxu0 0
      %2163 = vmatmul.mubr.bf16.gmra.mrb[0].mxu0 %v1932
      %v2164 = vpop.f32.mrb[0].mxu0
      %v2165 = vadd.f32 0.0, %v2164
      %v2166 = vpop.f32.mrb[0].mxu0
      %v2167 = vpop.f32.mrb[0].mxu0
      %v2168 = vadd.f32 0.0, %v2167
      %v2169 = vpop.f32.mrb[0].mxu0
      %2170 = vmatprep.mubr.bf16.mxu0 0
      %2171 = vmatmul.mubr.bf16.gmra.mrb[0].mxu0 %v1940
      %v2172 = vpop.f32.mrb[0].mxu0
      %v2173 = vadd.f32 0.0, %v2172
      %v2174 = vpop.f32.mrb[0].mxu0
      %v2175 = vpop.f32.mrb[0].mxu0
      %v2176 = vadd.f32 0.0, %v2175
      %v2177 = vpop.f32.mrb[0].mxu0
      %2178 = vmatprep.mubr.bf16.mxu0 0
      %2179 = vmatmul.mubr.bf16.gmra.mrb[0].mxu0 %v1948
      %v2180 = vpop.f32.mrb[0].mxu0
      %v2181 = vadd.f32 0.0, %v2180
      %v2182 = vpop.f32.mrb[0].mxu0
      %v2183 = vpop.f32.mrb[0].mxu0
      %v2184 = vadd.f32 0.0, %v2183
      %v2185 = vpop.f32.mrb[0].mxu0
      %2186 = vmatprep.mubr.bf16.mxu0 0
      %2187 = vmatmul.mubr.bf16.gmra.mrb[0].mxu0 %v1956
      %v2188 = vpop.f32.mrb[0].mxu0
      %v2189 = vadd.f32 0.0, %v2188
      %v2190 = vpop.f32.mrb[0].mxu0
      %v2191 = vpop.f32.mrb[0].mxu0
      %v2192 = vadd.f32 0.0, %v2191
      %v2193 = vpop.f32.mrb[0].mxu0
      %2194 = vmatprep.mubr.bf16.mxu0 0
      %2195 = vmatmul.mubr.bf16.gmra.mrb[0].mxu0 %v1964
      %v2196 = vpop.f32.mrb[0].mxu0
      %v2197 = vadd.f32 0.0, %v2196
      %v2198 = vpop.f32.mrb[0].mxu0
      %v2199 = vpop.f32.mrb[0].mxu0
      %v2200 = vadd.f32 0.0, %v2199
      %v2201 = vpop.f32.mrb[0].mxu0
      %2202 = vmatprep.mubr.bf16.mxu0 0
      %2203 = vmatmul.mubr.bf16.gmra.mrb[0].mxu0 %v1972
      %v2204 = vpop.f32.mrb[0].mxu0
      %v2205 = vadd.f32 0.0, %v2204
      %v2206 = vpop.f32.mrb[0].mxu0
      %v2207 = vpop.f32.mrb[0].mxu0
      %v2208 = vadd.f32 0.0, %v2207
      %v2209 = vpop.f32.mrb[0].mxu0
      %2210 = vmatprep.mubr.bf16.mxu0 0
      %2211 = vmatmul.mubr.bf16.gmra.mrb[0].mxu0 %v1980
      %v2212 = vpop.f32.mrb[0].mxu0
      %v2213 = vadd.f32 0.0, %v2212
      %v2214 = vpop.f32.mrb[0].mxu0
      %v2215 = vpop.f32.mrb[0].mxu0
      %v2216 = vadd.f32 0.0, %v2215
      %v2217 = vpop.f32.mrb[0].mxu0
      %2218 = vmatprep.mubr.bf16.mxu0 0
      %2219 = vmatmul.mubr.bf16.gmra.mrb[0].mxu0 %v1988
      %v2220 = vpop.f32.mrb[0].mxu0
      %v2221 = vadd.f32 0.0, %v2220
      %v2222 = vpop.f32.mrb[0].mxu0
      %v2223 = vpop.f32.mrb[0].mxu0
      %v2224 = vadd.f32 0.0, %v2223
      %v2225 = vpop.f32.mrb[0].mxu0
      %2226 = vmatprep.mubr.bf16.mxu0 0
      %2227 = vmatmul.mubr.bf16.gmra.mrb[0].mxu0 %v1996
      %v2228 = vpop.f32.mrb[0].mxu0
      %v2229 = vadd.f32 0.0, %v2228
      %v2230 = vpop.f32.mrb[0].mxu0
      %v2231 = vpop.f32.mrb[0].mxu0
      %v2232 = vadd.f32 0.0, %v2231
      %v2233 = vpop.f32.mrb[0].mxu0
      %2234 = vmatprep.mubr.bf16.mxu0 0
      %2235 = vmatmul.mubr.bf16.gmra.mrb[0].mxu0 %v2004
      %v2236 = vpop.f32.mrb[0].mxu0
      %v2237 = vadd.f32 0.0, %v2236
      %v2238 = vpop.f32.mrb[0].mxu0
      %v2239 = vpop.f32.mrb[0].mxu0
      %v2240 = vadd.f32 0.0, %v2239
      %v2241 = vpop.f32.mrb[0].mxu0
      %2242 = vmatprep.mubr.bf16.mxu0 0
      %2243 = vmatmul.mubr.bf16.gmra.mrb[0].mxu0 %v2012
      %v2244 = vpop.f32.mrb[0].mxu0
      %v2245 = vadd.f32 0.0, %v2244
      %v2246 = vpop.f32.mrb[0].mxu0
      %v2247 = vpop.f32.mrb[0].mxu0
      %v2248 = vadd.f32 0.0, %v2247
      %v2249 = vpop.f32.mrb[0].mxu0
      %2250 = vmatprep.mubr.bf16.mxu0 0
      %2251 = vmatmul.mubr.bf16.gmra.mrb[0].mxu0 %v2020
      %v2252 = vpop.f32.mrb[0].mxu0
      %v2253 = vadd.f32 0.0, %v2252
      %v2254 = vpop.f32.mrb[0].mxu0
      %v2255 = vpop.f32.mrb[0].mxu0
      %v2256 = vadd.f32 0.0, %v2255
      %v2257 = vpop.f32.mrb[0].mxu0
      %2258 = vmatprep.mubr.bf16.mxu0 0
      %2259 = vmatmul.mubr.bf16.gmra.mrb[0].mxu0 %v2028
      %v2260 = vpop.f32.mrb[0].mxu0
      %v2261 = vadd.f32 0.0, %v2260
      %v2262 = vpop.f32.mrb[0].mxu0
      %v2263 = vpop.f32.mrb[0].mxu0
      %v2264 = vadd.f32 0.0, %v2263
      %v2265 = vpop.f32.mrb[0].mxu0
      %2266 = vmatprep.mubr.bf16.mxu0 0
      %2267 = vmatmul.mubr.bf16.gmra.mrb[0].mxu0 %v2036
      %v2268 = vpop.f32.mrb[0].mxu0
      %v2269 = vadd.f32 0.0, %v2268
      %v2270 = vpop.f32.mrb[0].mxu0
      %v2271 = vpop.f32.mrb[0].mxu0
      %v2272 = vadd.f32 0.0, %v2271
      %v2273 = vpop.f32.mrb[0].mxu0
      %2274 = vmatprep.mubr.bf16.mxu0 0
      %2275 = vmatmul.mubr.bf16.gmra.mrb[0].mxu0 %v2044
      %v2276 = vpop.f32.mrb[0].mxu0
      %v2277 = vadd.f32 0.0, %v2276
      %v2278 = vpop.f32.mrb[0].mxu0
      %v2279 = vpop.f32.mrb[0].mxu0
      %v2280 = vadd.f32 0.0, %v2279
      %v2281 = vpop.f32.mrb[0].mxu0
      %2282 = vmatprep.mubr.bf16.mxu0 0
      %2283 = vmatmul.mubr.bf16.gmra.mrb[0].mxu0 %v2047
      %v2284 = vpop.f32.mrb[0].mxu0
      %v2285 = vadd.f32 0.0, %v2284
      %v2286 = vpop.f32.mrb[0].mxu0
      %v2287 = vpop.f32.mrb[0].mxu0
      %v2288 = vadd.f32 0.0, %v2287
      %v2289 = vpop.f32.mrb[0].mxu0
      %2290 = vdwg.mxu0
      %v2307 = vunpack.c.l.b16 %v1872
      %v2308 = vunpack.c.l.b16 %v1873
      %v2309 = vunpack.c.l.b16 %v1874
      %v2310 = vunpack.c.l.b16 %v1875
      %v2311 = vunpack.c.l.b16 %v1876
      %v2312 = vunpack.c.l.b16 %v1877
      %v2313 = vunpack.c.l.b16 %v1878
      %v2314 = vunpack.c.l.b16 %v1879
      %v2315 = vunpack.c.l.b16 %v1880
      %v2316 = vunpack.c.l.b16 %v1881
      %v2317 = vunpack.c.l.b16 %v1882
      %v2318 = vunpack.c.l.b16 %v1883
      %v2319 = vunpack.c.l.b16 %v1884
      %v2320 = vunpack.c.l.b16 %v1885
      %v2321 = vunpack.c.l.b16 %v1886
      %v2322 = vunpack.c.l.b16 %v1887
      %v2323 = vpack.c.b16 %v2308, %v2307
      %v2324 = vpack.c.b16 %v2310, %v2309
      %v2325 = vpack.c.b16 %v2312, %v2311
      %v2326 = vpack.c.b16 %v2314, %v2313
      %v2327 = vpack.c.b16 %v2316, %v2315
      %v2328 = vpack.c.b16 %v2318, %v2317
      %v2329 = vpack.c.b16 %v2320, %v2319
      %v2330 = vpack.c.b16 %v2322, %v2321
      %2339 = vmatprep.subr.bf16.mxu0 0
      %2340 = vmatpush1.bf16.msra.mxu0 %v2323
      %2341 = vmatprep.subr.bf16.mxu0 0
      %2342 = vmatpush1.bf16.msra.mxu0 %v2324
      %2343 = vmatprep.subr.bf16.mxu0 0
      %2344 = vmatpush1.bf16.msra.mxu0 %v2325
      %2345 = vmatprep.subr.bf16.mxu0 0
      %2346 = vmatpush1.bf16.msra.mxu0 %v2326
      %2347 = vmatprep.subr.bf16.mxu0 0
      %2348 = vmatpush1.bf16.msra.mxu0 %v2327
      %2349 = vmatprep.subr.bf16.mxu0 0
      %2350 = vmatpush1.bf16.msra.mxu0 %v2328
      %2351 = vmatprep.subr.bf16.mxu0 0
      %2352 = vmatpush1.bf16.msra.mxu0 %v2329
      %2353 = vmatprep.subr.bf16.mxu0 0
      %2354 = vmatpush1.bf16.msra.mxu0 %v2330
      %2355 = vmatprep.subr.bf16.mxu0 0
      %2356 = vmatpush1.bf16.msra.mxu0 0
      %2357 = vmatprep.subr.bf16.mxu0 0
      %2358 = vmatpush1.bf16.msra.mxu0 0
      %2359 = vmatprep.subr.bf16.mxu0 0
      %2360 = vmatpush1.bf16.msra.mxu0 0
      %2361 = vmatprep.subr.bf16.mxu0 0
      %2362 = vmatpush1.bf16.msra.mxu0 0
      %2363 = vmatprep.subr.bf16.mxu0 0
      %2364 = vmatpush1.bf16.msra.mxu0 0
      %2365 = vmatprep.subr.bf16.mxu0 0
      %2366 = vmatpush1.bf16.msra.mxu0 0
      %2367 = vmatprep.subr.bf16.mxu0 0
      %2368 = vmatpush1.bf16.msra.mxu0 0
      %2369 = vmatprep.subr.bf16.mxu0 0
      %2370 = vmatpush1.bf16.msra.mxu0 0
      %2371 = vmatprep.mubr.bf16.mxu0 0
      %2372 = vmatmul.mubr.bf16.gmra.mrb[0].mxu0 %v1854
      %v2373 = vpop.f32.mrb[0].mxu0
      %v2374 = vadd.f32 %v2149, %v2373
      %v2375 = vpop.f32.mrb[0].mxu0
      %v2376 = vpop.f32.mrb[0].mxu0
      %v2377 = vadd.f32 %v2152, %v2376
      %v2378 = vpop.f32.mrb[0].mxu0
      %2379 = vmatprep.mubr.bf16.mxu0 0
      %2380 = vmatmul.mubr.bf16.gmra.mrb[0].mxu0 %v1855
      %v2381 = vpop.f32.mrb[0].mxu0
      %v2382 = vadd.f32 %v2157, %v2381
      %v2383 = vpop.f32.mrb[0].mxu0
      %v2384 = vpop.f32.mrb[0].mxu0
      %v2385 = vadd.f32 %v2160, %v2384
      %v2386 = vpop.f32.mrb[0].mxu0
      %2387 = vmatprep.mubr.bf16.mxu0 0
      %2388 = vmatmul.mubr.bf16.gmra.mrb[0].mxu0 %v1856
      %v2389 = vpop.f32.mrb[0].mxu0
      %v2390 = vadd.f32 %v2165, %v2389
      %v2391 = vpop.f32.mrb[0].mxu0
      %v2392 = vpop.f32.mrb[0].mxu0
      %v2393 = vadd.f32 %v2168, %v2392
      %v2394 = vpop.f32.mrb[0].mxu0
      %2395 = vmatprep.mubr.bf16.mxu0 0
      %2396 = vmatmul.mubr.bf16.gmra.mrb[0].mxu0 %v1857
      %v2397 = vpop.f32.mrb[0].mxu0
      %v2398 = vadd.f32 %v2173, %v2397
      %v2399 = vpop.f32.mrb[0].mxu0
      %v2400 = vpop.f32.mrb[0].mxu0
      %v2401 = vadd.f32 %v2176, %v2400
      %v2402 = vpop.f32.mrb[0].mxu0
      %2403 = vmatprep.mubr.bf16.mxu0 0
      %2404 = vmatmul.mubr.bf16.gmra.mrb[0].mxu0 %v1858
      %v2405 = vpop.f32.mrb[0].mxu0
      %v2406 = vadd.f32 %v2181, %v2405
      %v2407 = vpop.f32.mrb[0].mxu0
      %v2408 = vpop.f32.mrb[0].mxu0
      %v2409 = vadd.f32 %v2184, %v2408
      %v2410 = vpop.f32.mrb[0].mxu0
      %2411 = vmatprep.mubr.bf16.mxu0 0
      %2412 = vmatmul.mubr.bf16.gmra.mrb[0].mxu0 %v1859
      %v2413 = vpop.f32.mrb[0].mxu0
      %v2414 = vadd.f32 %v2189, %v2413
      %v2415 = vpop.f32.mrb[0].mxu0
      %v2416 = vpop.f32.mrb[0].mxu0
      %v2417 = vadd.f32 %v2192, %v2416
      %v2418 = vpop.f32.mrb[0].mxu0
      %2419 = vmatprep.mubr.bf16.mxu0 0
      %2420 = vmatmul.mubr.bf16.gmra.mrb[0].mxu0 %v1860
      %v2421 = vpop.f32.mrb[0].mxu0
      %v2422 = vadd.f32 %v2197, %v2421
      %v2423 = vpop.f32.mrb[0].mxu0
      %v2424 = vpop.f32.mrb[0].mxu0
      %v2425 = vadd.f32 %v2200, %v2424
      %v2426 = vpop.f32.mrb[0].mxu0
      %2427 = vmatprep.mubr.bf16.mxu0 0
      %2428 = vmatmul.mubr.bf16.gmra.mrb[0].mxu0 %v1861
      %v2429 = vpop.f32.mrb[0].mxu0
      %v2430 = vadd.f32 %v2205, %v2429
      %v2431 = vpop.f32.mrb[0].mxu0
      %v2432 = vpop.f32.mrb[0].mxu0
      %v2433 = vadd.f32 %v2208, %v2432
      %v2434 = vpop.f32.mrb[0].mxu0
      %2435 = vmatprep.mubr.bf16.mxu0 0
      %2436 = vmatmul.mubr.bf16.gmra.mrb[0].mxu0 %v1862
      %v2437 = vpop.f32.mrb[0].mxu0
      %v2438 = vadd.f32 %v2213, %v2437
      %v2439 = vpop.f32.mrb[0].mxu0
      %v2440 = vpop.f32.mrb[0].mxu0
      %v2441 = vadd.f32 %v2216, %v2440
      %v2442 = vpop.f32.mrb[0].mxu0
      %2443 = vmatprep.mubr.bf16.mxu0 0
      %2444 = vmatmul.mubr.bf16.gmra.mrb[0].mxu0 %v1863
      %v2445 = vpop.f32.mrb[0].mxu0
      %v2446 = vadd.f32 %v2221, %v2445
      %v2447 = vpop.f32.mrb[0].mxu0
      %v2448 = vpop.f32.mrb[0].mxu0
      %v2449 = vadd.f32 %v2224, %v2448
      %v2450 = vpop.f32.mrb[0].mxu0
      %2451 = vmatprep.mubr.bf16.mxu0 0
      %2452 = vmatmul.mubr.bf16.gmra.mrb[0].mxu0 %v1864
      %v2453 = vpop.f32.mrb[0].mxu0
      %v2454 = vadd.f32 %v2229, %v2453
      %v2455 = vpop.f32.mrb[0].mxu0
      %v2456 = vpop.f32.mrb[0].mxu0
      %v2457 = vadd.f32 %v2232, %v2456
      %v2458 = vpop.f32.mrb[0].mxu0
      %2459 = vmatprep.mubr.bf16.mxu0 0
      %2460 = vmatmul.mubr.bf16.gmra.mrb[0].mxu0 %v1865
      %v2461 = vpop.f32.mrb[0].mxu0
      %v2462 = vadd.f32 %v2237, %v2461
      %v2463 = vpop.f32.mrb[0].mxu0
      %v2464 = vpop.f32.mrb[0].mxu0
      %v2465 = vadd.f32 %v2240, %v2464
      %v2466 = vpop.f32.mrb[0].mxu0
      %2467 = vmatprep.mubr.bf16.mxu0 0
      %2468 = vmatmul.mubr.bf16.gmra.mrb[0].mxu0 %v1866
      %v2469 = vpop.f32.mrb[0].mxu0
      %v2470 = vadd.f32 %v2245, %v2469
      %v2471 = vpop.f32.mrb[0].mxu0
      %v2472 = vpop.f32.mrb[0].mxu0
      %v2473 = vadd.f32 %v2248, %v2472
      %v2474 = vpop.f32.mrb[0].mxu0
      %2475 = vmatprep.mubr.bf16.mxu0 0
      %2476 = vmatmul.mubr.bf16.gmra.mrb[0].mxu0 %v1867
      %v2477 = vpop.f32.mrb[0].mxu0
      %v2478 = vadd.f32 %v2253, %v2477
      %v2479 = vpop.f32.mrb[0].mxu0
      %v2480 = vpop.f32.mrb[0].mxu0
      %v2481 = vadd.f32 %v2256, %v2480
      %v2482 = vpop.f32.mrb[0].mxu0
      %2483 = vmatprep.mubr.bf16.mxu0 0
      %2484 = vmatmul.mubr.bf16.gmra.mrb[0].mxu0 %v1868
      %v2485 = vpop.f32.mrb[0].mxu0
      %v2486 = vadd.f32 %v2261, %v2485
      %v2487 = vpop.f32.mrb[0].mxu0
      %v2488 = vpop.f32.mrb[0].mxu0
      %v2489 = vadd.f32 %v2264, %v2488
      %v2490 = vpop.f32.mrb[0].mxu0
      %2491 = vmatprep.mubr.bf16.mxu0 0
      %2492 = vmatmul.mubr.bf16.gmra.mrb[0].mxu0 %v1869
      %v2493 = vpop.f32.mrb[0].mxu0
      %v2494 = vadd.f32 %v2269, %v2493
      %v2495 = vpop.f32.mrb[0].mxu0
      %v2496 = vpop.f32.mrb[0].mxu0
      %v2497 = vadd.f32 %v2272, %v2496
      %v2498 = vpop.f32.mrb[0].mxu0
      %2499 = vmatprep.mubr.bf16.mxu0 0
      %2500 = vmatmul.mubr.bf16.gmra.mrb[0].mxu0 %v1870
      %v2501 = vpop.f32.mrb[0].mxu0
      %v2502 = vadd.f32 %v2277, %v2501
      %v2503 = vpop.f32.mrb[0].mxu0
      %v2504 = vpop.f32.mrb[0].mxu0
      %v2505 = vadd.f32 %v2280, %v2504
      %v2506 = vpop.f32.mrb[0].mxu0
      %2507 = vmatprep.mubr.bf16.mxu0 0
      %2508 = vmatmul.mubr.bf16.gmra.mrb[0].mxu0 %v1871
      %v2509 = vpop.f32.mrb[0].mxu0
      %v2510 = vadd.f32 %v2285, %v2509
      %v2511 = vpop.f32.mrb[0].mxu0
      %v2512 = vpop.f32.mrb[0].mxu0
      %v2513 = vadd.f32 %v2288, %v2512
      %v2514 = vpop.f32.mrb[0].mxu0
      %2515 = vdwg.mxu0
      %s2516 = scalar_lea.vmem %s4, 128
      %v2517 = vld [vmem:[%s2516] sm:$0xf]
      %v2518 = vld [vmem:[%s2516 + $0x4] sm:$0xf]
      %v2519 = vld [vmem:[%s2516 + $0x8] sm:$0xf]
      %v2520 = vld [vmem:[%s2516 + $0xc] sm:$0xf]
      %v2521 = vld [vmem:[%s2516 + $0x10] sm:$0xf]
      %v2522 = vld [vmem:[%s2516 + $0x14] sm:$0xf]
      %v2523 = vld [vmem:[%s2516 + $0x18] sm:$0xf]
      %v2524 = vld [vmem:[%s2516 + $0x1c] sm:$0xf]
      %v2525 = vld [vmem:[%s2516 + $0x20] sm:$0xf]
      %v2526 = vld [vmem:[%s2516 + $0x24] sm:$0xf]
      %v2527 = vld [vmem:[%s2516 + $0x28] sm:$0xf]
      %v2528 = vld [vmem:[%s2516 + $0x2c] sm:$0xf]
      %v2529 = vld [vmem:[%s2516 + $0x30] sm:$0xf]
      %v2530 = vld [vmem:[%s2516 + $0x34] sm:$0xf]
      %v2531 = vld [vmem:[%s2516 + $0x38] sm:$0xf]
      %v2532 = vld [vmem:[%s2516 + $0x3c] sm:$0xf]
      %v2551 = vrot.slane %v1854, 1
      %v2552 = vrot.slane %v1855, 1
      %v2553 = vsel %vm1062, %v2551, %v2552
      %v2554 = vrot.slane %v1856, 1
      %v2555 = vsel %vm1062, %v2552, %v2554
      %v2556 = vrot.slane %v1857, 1
      %v2557 = vsel %vm1062, %v2554, %v2556
      %v2558 = vrot.slane %v1858, 1
      %v2559 = vsel %vm1062, %v2556, %v2558
      %v2560 = vrot.slane %v1859, 1
      %v2561 = vsel %vm1062, %v2558, %v2560
      %v2562 = vrot.slane %v1860, 1
      %v2563 = vsel %vm1062, %v2560, %v2562
      %v2564 = vrot.slane %v1861, 1
      %v2565 = vsel %vm1062, %v2562, %v2564
      %v2566 = vrot.slane %v1862, 1
      %v2567 = vsel %vm1062, %v2564, %v2566
      %v2568 = vrot.slane %v1863, 1
      %v2569 = vsel %vm1062, %v2566, %v2568
      %v2570 = vrot.slane %v1864, 1
      %v2571 = vsel %vm1062, %v2568, %v2570
      %v2572 = vrot.slane %v1865, 1
      %v2573 = vsel %vm1062, %v2570, %v2572
      %v2574 = vrot.slane %v1866, 1
      %v2575 = vsel %vm1062, %v2572, %v2574
      %v2576 = vrot.slane %v1867, 1
      %v2577 = vsel %vm1062, %v2574, %v2576
      %v2578 = vrot.slane %v1868, 1
      %v2579 = vsel %vm1062, %v2576, %v2578
      %v2580 = vrot.slane %v1869, 1
      %v2581 = vsel %vm1062, %v2578, %v2580
      %v2582 = vrot.slane %v1870, 1
      %v2583 = vsel %vm1062, %v2580, %v2582
      %v2584 = vrot.slane %v1871, 1
      %v2585 = vsel %vm1062, %v2582, %v2584
      %v2620 = vunpack.c.l.b16 %v2517
      %v2621 = vunpack.c.l.b16 %v2518
      %v2622 = vunpack.c.l.b16 %v2519
      %v2623 = vunpack.c.l.b16 %v2520
      %v2624 = vunpack.c.l.b16 %v2521
      %v2625 = vunpack.c.l.b16 %v2522
      %v2626 = vunpack.c.l.b16 %v2523
      %v2627 = vunpack.c.l.b16 %v2524
      %v2628 = vunpack.c.l.b16 %v2525
      %v2629 = vunpack.c.l.b16 %v2526
      %v2630 = vunpack.c.l.b16 %v2527
      %v2631 = vunpack.c.l.b16 %v2528
      %v2632 = vunpack.c.l.b16 %v2529
      %v2633 = vunpack.c.l.b16 %v2530
      %v2634 = vunpack.c.l.b16 %v2531
      %v2635 = vunpack.c.l.b16 %v2532
      %v2636 = vpack.c.b16 %v2621, %v2620
      %v2637 = vpack.c.b16 %v2623, %v2622
      %v2638 = vpack.c.b16 %v2625, %v2624
      %v2639 = vpack.c.b16 %v2627, %v2626
      %v2640 = vpack.c.b16 %v2629, %v2628
      %v2641 = vpack.c.b16 %v2631, %v2630
      %v2642 = vpack.c.b16 %v2633, %v2632
      %v2643 = vpack.c.b16 %v2635, %v2634
      %2652 = vmatprep.subr.bf16.mxu0 0
      %2653 = vmatpush1.bf16.msra.mxu0 %v2636
      %2654 = vmatprep.subr.bf16.mxu0 0
      %2655 = vmatpush1.bf16.msra.mxu0 %v2637
      %2656 = vmatprep.subr.bf16.mxu0 0
      %2657 = vmatpush1.bf16.msra.mxu0 %v2638
      %2658 = vmatprep.subr.bf16.mxu0 0
      %2659 = vmatpush1.bf16.msra.mxu0 %v2639
      %2660 = vmatprep.subr.bf16.mxu0 0
      %2661 = vmatpush1.bf16.msra.mxu0 %v2640
      %2662 = vmatprep.subr.bf16.mxu0 0
      %2663 = vmatpush1.bf16.msra.mxu0 %v2641
      %2664 = vmatprep.subr.bf16.mxu0 0
      %2665 = vmatpush1.bf16.msra.mxu0 %v2642
      %2666 = vmatprep.subr.bf16.mxu0 0
      %2667 = vmatpush1.bf16.msra.mxu0 %v2643
      %2668 = vmatprep.subr.bf16.mxu0 0
      %2669 = vmatpush1.bf16.msra.mxu0 0
      %2670 = vmatprep.subr.bf16.mxu0 0
      %2671 = vmatpush1.bf16.msra.mxu0 0
      %2672 = vmatprep.subr.bf16.mxu0 0
      %2673 = vmatpush1.bf16.msra.mxu0 0
      %2674 = vmatprep.subr.bf16.mxu0 0
      %2675 = vmatpush1.bf16.msra.mxu0 0
      %2676 = vmatprep.subr.bf16.mxu0 0
      %2677 = vmatpush1.bf16.msra.mxu0 0
      %2678 = vmatprep.subr.bf16.mxu0 0
      %2679 = vmatpush1.bf16.msra.mxu0 0
      %2680 = vmatprep.subr.bf16.mxu0 0
      %2681 = vmatpush1.bf16.msra.mxu0 0
      %2682 = vmatprep.subr.bf16.mxu0 0
      %2683 = vmatpush1.bf16.msra.mxu0 0
      %2684 = vmatprep.mubr.bf16.mxu0 0
      %2685 = vmatmul.mubr.bf16.gmra.mrb[0].mxu0 %v2553
      %v2686 = vpop.f32.mrb[0].mxu0
      %v2687 = vadd.f32 0.0, %v2686
      %v2688 = vpop.f32.mrb[0].mxu0
      %v2689 = vpop.f32.mrb[0].mxu0
      %v2690 = vadd.f32 0.0, %v2689
      %v2691 = vpop.f32.mrb[0].mxu0
      %2692 = vmatprep.mubr.bf16.mxu0 0
      %2693 = vmatmul.mubr.bf16.gmra.mrb[0].mxu0 %v2555
      %v2694 = vpop.f32.mrb[0].mxu0
      %v2695 = vadd.f32 0.0, %v2694
      %v2696 = vpop.f32.mrb[0].mxu0
      %v2697 = vpop.f32.mrb[0].mxu0
      %v2698 = vadd.f32 0.0, %v2697
      %v2699 = vpop.f32.mrb[0].mxu0
      %2700 = vmatprep.mubr.bf16.mxu0 0
      %2701 = vmatmul.mubr.bf16.gmra.mrb[0].mxu0 %v2557
      %v2702 = vpop.f32.mrb[0].mxu0
      %v2703 = vadd.f32 0.0, %v2702
      %v2704 = vpop.f32.mrb[0].mxu0
      %v2705 = vpop.f32.mrb[0].mxu0
      %v2706 = vadd.f32 0.0, %v2705
      %v2707 = vpop.f32.mrb[0].mxu0
      %2708 = vmatprep.mubr.bf16.mxu0 0
      %2709 = vmatmul.mubr.bf16.gmra.mrb[0].mxu0 %v2559
      %v2710 = vpop.f32.mrb[0].mxu0
      %v2711 = vadd.f32 0.0, %v2710
      %v2712 = vpop.f32.mrb[0].mxu0
      %v2713 = vpop.f32.mrb[0].mxu0
      %v2714 = vadd.f32 0.0, %v2713
      %v2715 = vpop.f32.mrb[0].mxu0
      %2716 = vmatprep.mubr.bf16.mxu0 0
      %2717 = vmatmul.mubr.bf16.gmra.mrb[0].mxu0 %v2561
      %v2718 = vpop.f32.mrb[0].mxu0
      %v2719 = vadd.f32 0.0, %v2718
      %v2720 = vpop.f32.mrb[0].mxu0
      %v2721 = vpop.f32.mrb[0].mxu0
      %v2722 = vadd.f32 0.0, %v2721
      %v2723 = vpop.f32.mrb[0].mxu0
      %2724 = vmatprep.mubr.bf16.mxu0 0
      %2725 = vmatmul.mubr.bf16.gmra.mrb[0].mxu0 %v2563
      %v2726 = vpop.f32.mrb[0].mxu0
      %v2727 = vadd.f32 0.0, %v2726
      %v2728 = vpop.f32.mrb[0].mxu0
      %v2729 = vpop.f32.mrb[0].mxu0
      %v2730 = vadd.f32 0.0, %v2729
      %v2731 = vpop.f32.mrb[0].mxu0
      %2732 = vmatprep.mubr.bf16.mxu0 0
      %2733 = vmatmul.mubr.bf16.gmra.mrb[0].mxu0 %v2565
      %v2734 = vpop.f32.mrb[0].mxu0
      %v2735 = vadd.f32 0.0, %v2734
      %v2736 = vpop.f32.mrb[0].mxu0
      %v2737 = vpop.f32.mrb[0].mxu0
      %v2738 = vadd.f32 0.0, %v2737
      %v2739 = vpop.f32.mrb[0].mxu0
      %2740 = vmatprep.mubr.bf16.mxu0 0
      %2741 = vmatmul.mubr.bf16.gmra.mrb[0].mxu0 %v2567
      %v2742 = vpop.f32.mrb[0].mxu0
      %v2743 = vadd.f32 0.0, %v2742
      %v2744 = vpop.f32.mrb[0].mxu0
      %v2745 = vpop.f32.mrb[0].mxu0
      %v2746 = vadd.f32 0.0, %v2745
      %v2747 = vpop.f32.mrb[0].mxu0
      %2748 = vmatprep.mubr.bf16.mxu0 0
      %2749 = vmatmul.mubr.bf16.gmra.mrb[0].mxu0 %v2569
      %v2750 = vpop.f32.mrb[0].mxu0
      %v2751 = vadd.f32 0.0, %v2750
      %v2752 = vpop.f32.mrb[0].mxu0
      %v2753 = vpop.f32.mrb[0].mxu0
      %v2754 = vadd.f32 0.0, %v2753
      %v2755 = vpop.f32.mrb[0].mxu0
      %2756 = vmatprep.mubr.bf16.mxu0 0
      %2757 = vmatmul.mubr.bf16.gmra.mrb[0].mxu0 %v2571
      %v2758 = vpop.f32.mrb[0].mxu0
      %v2759 = vadd.f32 0.0, %v2758
      %v2760 = vpop.f32.mrb[0].mxu0
      %v2761 = vpop.f32.mrb[0].mxu0
      %v2762 = vadd.f32 0.0, %v2761
      %v2763 = vpop.f32.mrb[0].mxu0
      %2764 = vmatprep.mubr.bf16.mxu0 0
      %2765 = vmatmul.mubr.bf16.gmra.mrb[0].mxu0 %v2573
      %v2766 = vpop.f32.mrb[0].mxu0
      %v2767 = vadd.f32 0.0, %v2766
      %v2768 = vpop.f32.mrb[0].mxu0
      %v2769 = vpop.f32.mrb[0].mxu0
      %v2770 = vadd.f32 0.0, %v2769
      %v2771 = vpop.f32.mrb[0].mxu0
      %2772 = vmatprep.mubr.bf16.mxu0 0
      %2773 = vmatmul.mubr.bf16.gmra.mrb[0].mxu0 %v2575
      %v2774 = vpop.f32.mrb[0].mxu0
      %v2775 = vadd.f32 0.0, %v2774
      %v2776 = vpop.f32.mrb[0].mxu0
      %v2777 = vpop.f32.mrb[0].mxu0
      %v2778 = vadd.f32 0.0, %v2777
      %v2779 = vpop.f32.mrb[0].mxu0
      %2780 = vmatprep.mubr.bf16.mxu0 0
      %2781 = vmatmul.mubr.bf16.gmra.mrb[0].mxu0 %v2577
      %v2782 = vpop.f32.mrb[0].mxu0
      %v2783 = vadd.f32 0.0, %v2782
      %v2784 = vpop.f32.mrb[0].mxu0
      %v2785 = vpop.f32.mrb[0].mxu0
      %v2786 = vadd.f32 0.0, %v2785
      %v2787 = vpop.f32.mrb[0].mxu0
      %2788 = vmatprep.mubr.bf16.mxu0 0
      %2789 = vmatmul.mubr.bf16.gmra.mrb[0].mxu0 %v2579
      %v2790 = vpop.f32.mrb[0].mxu0
      %v2791 = vadd.f32 0.0, %v2790
      %v2792 = vpop.f32.mrb[0].mxu0
      %v2793 = vpop.f32.mrb[0].mxu0
      %v2794 = vadd.f32 0.0, %v2793
      %v2795 = vpop.f32.mrb[0].mxu0
      %2796 = vmatprep.mubr.bf16.mxu0 0
      %2797 = vmatmul.mubr.bf16.gmra.mrb[0].mxu0 %v2581
      %v2798 = vpop.f32.mrb[0].mxu0
      %v2799 = vadd.f32 0.0, %v2798
      %v2800 = vpop.f32.mrb[0].mxu0
      %v2801 = vpop.f32.mrb[0].mxu0
      %v2802 = vadd.f32 0.0, %v2801
      %v2803 = vpop.f32.mrb[0].mxu0
      %2804 = vmatprep.mubr.bf16.mxu0 0
      %2805 = vmatmul.mubr.bf16.gmra.mrb[0].mxu0 %v2583
      %v2806 = vpop.f32.mrb[0].mxu0
      %v2807 = vadd.f32 0.0, %v2806
      %v2808 = vpop.f32.mrb[0].mxu0
      %v2809 = vpop.f32.mrb[0].mxu0
      %v2810 = vadd.f32 0.0, %v2809
      %v2811 = vpop.f32.mrb[0].mxu0
      %2812 = vmatprep.mubr.bf16.mxu0 0
      %2813 = vmatmul.mubr.bf16.gmra.mrb[0].mxu0 %v2585
      %v2814 = vpop.f32.mrb[0].mxu0
      %v2815 = vadd.f32 0.0, %v2814
      %v2816 = vpop.f32.mrb[0].mxu0
      %v2817 = vpop.f32.mrb[0].mxu0
      %v2818 = vadd.f32 0.0, %v2817
      %v2819 = vpop.f32.mrb[0].mxu0
      %2820 = vmatprep.mubr.bf16.mxu0 0
      %2821 = vmatmul.mubr.bf16.gmra.mrb[0].mxu0 %v2584
      %v2822 = vpop.f32.mrb[0].mxu0
      %v2823 = vadd.f32 0.0, %v2822
      %v2824 = vpop.f32.mrb[0].mxu0
      %v2825 = vpop.f32.mrb[0].mxu0
      %v2826 = vadd.f32 0.0, %v2825
      %v2827 = vpop.f32.mrb[0].mxu0
      %2828 = vdwg.mxu0
      %v2829 = vadd.f32 %v2374, %v2687
      %v2830 = vadd.f32 %v2377, %v2690
      %v2831 = vadd.f32 %v2382, %v2695
      %v2832 = vadd.f32 %v2385, %v2698
      %v2833 = vadd.f32 %v2390, %v2703
      %v2834 = vadd.f32 %v2393, %v2706
      %v2835 = vadd.f32 %v2398, %v2711
      %v2836 = vadd.f32 %v2401, %v2714
      %v2837 = vadd.f32 %v2406, %v2719
      %v2838 = vadd.f32 %v2409, %v2722
      %v2839 = vadd.f32 %v2414, %v2727
      %v2840 = vadd.f32 %v2417, %v2730
      %v2841 = vadd.f32 %v2422, %v2735
      %v2842 = vadd.f32 %v2425, %v2738
      %v2843 = vadd.f32 %v2430, %v2743
      %v2844 = vadd.f32 %v2433, %v2746
      %v2845 = vadd.f32 %v2438, %v2751
      %v2846 = vadd.f32 %v2441, %v2754
      %v2847 = vadd.f32 %v2446, %v2759
      %v2848 = vadd.f32 %v2449, %v2762
      %v2849 = vadd.f32 %v2454, %v2767
      %v2850 = vadd.f32 %v2457, %v2770
      %v2851 = vadd.f32 %v2462, %v2775
      %v2852 = vadd.f32 %v2465, %v2778
      %v2853 = vadd.f32 %v2470, %v2783
      %v2854 = vadd.f32 %v2473, %v2786
      %v2855 = vadd.f32 %v2478, %v2791
      %v2856 = vadd.f32 %v2481, %v2794
      %v2857 = vadd.f32 %v2486, %v2799
      %v2858 = vadd.f32 %v2489, %v2802
      %v2859 = vadd.f32 %v2494, %v2807
      %v2860 = vadd.f32 %v2497, %v2810
      %v2861 = vadd.f32 %v2502, %v2815
      %v2862 = vadd.f32 %v2505, %v2818
      %v2863 = vadd.f32 %v2510, %v2823
      %v2864 = vadd.f32 %v2513, %v2826
      %v2865 = vld [vmem:[%s5] sm:$0x1]
      %v2867 = vlaneseq
      %v2868 = vshrl.u32 %v2867, 7
      %v2869 = vsub.s32 0, %v2868
      %v2870 = vrot.slane %v2865, %v2869
      %v2872 = vadd.f32 %v2829, %v2870
      %v2873 = vadd.f32 %v2830, %v2870
      %v2874 = vadd.f32 %v2831, %v2870
      %v2875 = vadd.f32 %v2832, %v2870
      %v2876 = vadd.f32 %v2833, %v2870
      %v2877 = vadd.f32 %v2834, %v2870
      %v2878 = vadd.f32 %v2835, %v2870
      %v2879 = vadd.f32 %v2836, %v2870
      %v2880 = vadd.f32 %v2837, %v2870
      %v2881 = vadd.f32 %v2838, %v2870
      %v2882 = vadd.f32 %v2839, %v2870
      %v2883 = vadd.f32 %v2840, %v2870
      %v2884 = vadd.f32 %v2841, %v2870
      %v2885 = vadd.f32 %v2842, %v2870
      %v2886 = vadd.f32 %v2843, %v2870
      %v2887 = vadd.f32 %v2844, %v2870
      %v2888 = vadd.f32 %v2845, %v2870
      %v2889 = vadd.f32 %v2846, %v2870
      %v2890 = vadd.f32 %v2847, %v2870
      %v2891 = vadd.f32 %v2848, %v2870
      %v2892 = vadd.f32 %v2849, %v2870
      %v2893 = vadd.f32 %v2850, %v2870
      %v2894 = vadd.f32 %v2851, %v2870
      %v2895 = vadd.f32 %v2852, %v2870
      %v2896 = vadd.f32 %v2853, %v2870
      %v2897 = vadd.f32 %v2854, %v2870
      %v2898 = vadd.f32 %v2855, %v2870
      %v2899 = vadd.f32 %v2856, %v2870
      %v2900 = vadd.f32 %v2857, %v2870
      %v2901 = vadd.f32 %v2858, %v2870
      %v2902 = vadd.f32 %v2859, %v2870
      %v2903 = vadd.f32 %v2860, %v2870
      %v2904 = vadd.f32 %v2861, %v2870
      %v2905 = vadd.f32 %v2862, %v2870
      %v2906 = vadd.f32 %v2863, %v2870
      %v2907 = vadd.f32 %v2864, %v2870
      %vm2908 = vcmp.ge.f32.partialorder %v2872, 0.0
      %vm2909 = vcmp.ge.f32.partialorder %v2873, 0.0
      %vm2910 = vcmp.ge.f32.partialorder %v2874, 0.0
      %vm2911 = vcmp.ge.f32.partialorder %v2875, 0.0
      %vm2912 = vcmp.ge.f32.partialorder %v2876, 0.0
      %vm2913 = vcmp.ge.f32.partialorder %v2877, 0.0
      %vm2914 = vcmp.ge.f32.partialorder %v2878, 0.0
      %vm2915 = vcmp.ge.f32.partialorder %v2879, 0.0
      %vm2916 = vcmp.ge.f32.partialorder %v2880, 0.0
      %vm2917 = vcmp.ge.f32.partialorder %v2881, 0.0
      %vm2918 = vcmp.ge.f32.partialorder %v2882, 0.0
      %vm2919 = vcmp.ge.f32.partialorder %v2883, 0.0
      %vm2920 = vcmp.ge.f32.partialorder %v2884, 0.0
      %vm2921 = vcmp.ge.f32.partialorder %v2885, 0.0
      %vm2922 = vcmp.ge.f32.partialorder %v2886, 0.0
      %vm2923 = vcmp.ge.f32.partialorder %v2887, 0.0
      %vm2924 = vcmp.ge.f32.partialorder %v2888, 0.0
      %vm2925 = vcmp.ge.f32.partialorder %v2889, 0.0
      %vm2926 = vcmp.ge.f32.partialorder %v2890, 0.0
      %vm2927 = vcmp.ge.f32.partialorder %v2891, 0.0
      %vm2928 = vcmp.ge.f32.partialorder %v2892, 0.0
      %vm2929 = vcmp.ge.f32.partialorder %v2893, 0.0
      %vm2930 = vcmp.ge.f32.partialorder %v2894, 0.0
      %vm2931 = vcmp.ge.f32.partialorder %v2895, 0.0
      %vm2932 = vcmp.ge.f32.partialorder %v2896, 0.0
      %vm2933 = vcmp.ge.f32.partialorder %v2897, 0.0
      %vm2934 = vcmp.ge.f32.partialorder %v2898, 0.0
      %vm2935 = vcmp.ge.f32.partialorder %v2899, 0.0
      %vm2936 = vcmp.ge.f32.partialorder %v2900, 0.0
      %vm2937 = vcmp.ge.f32.partialorder %v2901, 0.0
      %vm2938 = vcmp.ge.f32.partialorder %v2902, 0.0
      %vm2939 = vcmp.ge.f32.partialorder %v2903, 0.0
      %vm2940 = vcmp.ge.f32.partialorder %v2904, 0.0
      %vm2941 = vcmp.ge.f32.partialorder %v2905, 0.0
      %vm2942 = vcmp.ge.f32.partialorder %v2906, 0.0
      %vm2943 = vcmp.ge.f32.partialorder %v2907, 0.0
      %v2944 = vmul.f32 %v2872, 0.1
      %v2945 = vmul.f32 %v2873, 0.1
      %v2946 = vmul.f32 %v2874, 0.1
      %v2947 = vmul.f32 %v2875, 0.1
      %v2948 = vmul.f32 %v2876, 0.1
      %v2949 = vmul.f32 %v2877, 0.1
      %v2950 = vmul.f32 %v2878, 0.1
      %v2951 = vmul.f32 %v2879, 0.1
      %v2952 = vmul.f32 %v2880, 0.1
      %v2953 = vmul.f32 %v2881, 0.1
      %v2954 = vmul.f32 %v2882, 0.1
      %v2955 = vmul.f32 %v2883, 0.1
      %v2956 = vmul.f32 %v2884, 0.1
      %v2957 = vmul.f32 %v2885, 0.1
      %v2958 = vmul.f32 %v2886, 0.1
      %v2959 = vmul.f32 %v2887, 0.1
      %v2960 = vmul.f32 %v2888, 0.1
      %v2961 = vmul.f32 %v2889, 0.1
      %v2962 = vmul.f32 %v2890, 0.1
      %v2963 = vmul.f32 %v2891, 0.1
      %v2964 = vmul.f32 %v2892, 0.1
      %v2965 = vmul.f32 %v2893, 0.1
      %v2966 = vmul.f32 %v2894, 0.1
      %v2967 = vmul.f32 %v2895, 0.1
      %v2968 = vmul.f32 %v2896, 0.1
      %v2969 = vmul.f32 %v2897, 0.1
      %v2970 = vmul.f32 %v2898, 0.1
      %v2971 = vmul.f32 %v2899, 0.1
      %v2972 = vmul.f32 %v2900, 0.1
      %v2973 = vmul.f32 %v2901, 0.1
      %v2974 = vmul.f32 %v2902, 0.1
      %v2975 = vmul.f32 %v2903, 0.1
      %v2976 = vmul.f32 %v2904, 0.1
      %v2977 = vmul.f32 %v2905, 0.1
      %v2978 = vmul.f32 %v2906, 0.1
      %v2979 = vmul.f32 %v2907, 0.1
      %v2980 = vsel %vm2908, %v2872, %v2944
      %v2981 = vsel %vm2909, %v2873, %v2945
      %v2982 = vsel %vm2910, %v2874, %v2946
      %v2983 = vsel %vm2911, %v2875, %v2947
      %v2984 = vsel %vm2912, %v2876, %v2948
      %v2985 = vsel %vm2913, %v2877, %v2949
      %v2986 = vsel %vm2914, %v2878, %v2950
      %v2987 = vsel %vm2915, %v2879, %v2951
      %v2988 = vsel %vm2916, %v2880, %v2952
      %v2989 = vsel %vm2917, %v2881, %v2953
      %v2990 = vsel %vm2918, %v2882, %v2954
      %v2991 = vsel %vm2919, %v2883, %v2955
      %v2992 = vsel %vm2920, %v2884, %v2956
      %v2993 = vsel %vm2921, %v2885, %v2957
      %v2994 = vsel %vm2922, %v2886, %v2958
      %v2995 = vsel %vm2923, %v2887, %v2959
      %v2996 = vsel %vm2924, %v2888, %v2960
      %v2997 = vsel %vm2925, %v2889, %v2961
      %v2998 = vsel %vm2926, %v2890, %v2962
      %v2999 = vsel %vm2927, %v2891, %v2963
      %v3000 = vsel %vm2928, %v2892, %v2964
      %v3001 = vsel %vm2929, %v2893, %v2965
      %v3002 = vsel %vm2930, %v2894, %v2966
      %v3003 = vsel %vm2931, %v2895, %v2967
      %v3004 = vsel %vm2932, %v2896, %v2968
      %v3005 = vsel %vm2933, %v2897, %v2969
      %v3006 = vsel %vm2934, %v2898, %v2970
      %v3007 = vsel %vm2935, %v2899, %v2971
      %v3008 = vsel %vm2936, %v2900, %v2972
      %v3009 = vsel %vm2937, %v2901, %v2973
      %v3010 = vsel %vm2938, %v2902, %v2974
      %v3011 = vsel %vm2939, %v2903, %v2975
      %v3012 = vsel %vm2940, %v2904, %v2976
      %v3013 = vsel %vm2941, %v2905, %v2977
      %v3014 = vsel %vm2942, %v2906, %v2978
      %v3015 = vsel %vm2943, %v2907, %v2979
      %3016 = vst [vmem:[%s253] sm:$0xff] %v2980
      %3017 = vst [vmem:[%s253 + $0x8] sm:$0xff] %v2981
      %3018 = vst [vmem:[%s253 + $0x10] sm:$0xff] %v2982
      %3019 = vst [vmem:[%s253 + $0x18] sm:$0xff] %v2983
      %3020 = vst [vmem:[%s253 + $0x20] sm:$0xff] %v2984
      %3021 = vst [vmem:[%s253 + $0x28] sm:$0xff] %v2985
      %3022 = vst [vmem:[%s253 + $0x30] sm:$0xff] %v2986
      %3023 = vst [vmem:[%s253 + $0x38] sm:$0xff] %v2987
      %3024 = vst [vmem:[%s253 + $0x40] sm:$0xff] %v2988
      %3025 = vst [vmem:[%s253 + $0x48] sm:$0xff] %v2989
      %3026 = vst [vmem:[%s253 + $0x50] sm:$0xff] %v2990
      %3027 = vst [vmem:[%s253 + $0x58] sm:$0xff] %v2991
      %3028 = vst [vmem:[%s253 + $0x60] sm:$0xff] %v2992
      %3029 = vst [vmem:[%s253 + $0x68] sm:$0xff] %v2993
      %3030 = vst [vmem:[%s253 + $0x70] sm:$0xff] %v2994
      %3031 = vst [vmem:[%s253 + $0x78] sm:$0xff] %v2995
      %3032 = vst [vmem:[%s253 + $0x80] sm:$0xff] %v2996
      %3033 = vst [vmem:[%s253 + $0x88] sm:$0xff] %v2997
      %3034 = vst [vmem:[%s253 + $0x90] sm:$0xff] %v2998
      %3035 = vst [vmem:[%s253 + $0x98] sm:$0xff] %v2999
      %3036 = vst [vmem:[%s253 + $0xa0] sm:$0xff] %v3000
      %3037 = vst [vmem:[%s253 + $0xa8] sm:$0xff] %v3001
      %3038 = vst [vmem:[%s253 + $0xb0] sm:$0xff] %v3002
      %3039 = vst [vmem:[%s253 + $0xb8] sm:$0xff] %v3003
      %3040 = vst [vmem:[%s253 + $0xc0] sm:$0xff] %v3004
      %3041 = vst [vmem:[%s253 + $0xc8] sm:$0xff] %v3005
      %3042 = vst [vmem:[%s253 + $0xd0] sm:$0xff] %v3006
      %3043 = vst [vmem:[%s253 + $0xd8] sm:$0xff] %v3007
      %3044 = vst [vmem:[%s253 + $0xe0] sm:$0xff] %v3008
      %3045 = vst [vmem:[%s253 + $0xe8] sm:$0xff] %v3009
      %3046 = vst [vmem:[%s253 + $0xf0] sm:$0xff] %v3010
      %3047 = vst [vmem:[%s253 + $0xf8] sm:$0xff] %v3011
      %3048 = vst [vmem:[%s253 + $0x100] sm:$0xff] %v3012
      %3049 = vst [vmem:[%s253 + $0x108] sm:$0xff] %v3013
      %3050 = vst [vmem:[%s253 + $0x110] sm:$0xff] %v3014
      %3051 = vst [vmem:[%s253 + $0x118] sm:$0x3f] %v3015
      %3052 = vst [vmem:[%s253 + $0x11e] sm:$0x3] 0.0
      %s3053 = smul.u32 36, %s17
      %p3054 = scmp.lt.s32.totalorder %s3053, 71
      %s3055 = scalar_select %p3054, %s3053, 71
      %s3056 = smul.addr %s3055, 8
      %s3057 = scalar_lea.vmem %s6, %s3056
      // Predicated region
      $region45: #{residual_forward.1} parent=43 // pred_check
        %p3058 = pneg %p166
      $region46: #{residual_forward.1} parent=43 // pred_check_branch
        %3060 = sbr.rel (%p3058) target = $region48
      $region47: #{residual_forward.1} parent=43 // pred_region
        %s3061 = smul.u32 36, %s17
      $region48: #{residual_forward.1} parent=43 // pred_fallthru
        _
    $region44: #{residual_forward.1} parent=5 // pred_fallthru
      _
    %p3062 = scmp.le.s32.totalorder 2, %s12
    // Predicated region
    $region49: #{residual_forward.1} parent=5 // pred_check
      %p3063 = pneg %p3062
    $region50: #{residual_forward.1} parent=5 // pred_check_branch
      %3065 = sbr.rel (%p3063) target = $region52
    $region51: #{residual_forward.1} parent=5 // pred_region
      %s3066 = ssub.s32 %s12, 2
      // Predicated region
      $region53: #{residual_forward.1} parent=51 // pred_check
        %p3067 = pneg %p172
      $region54: #{residual_forward.1} parent=51 // pred_check_branch
        %3069 = sbr.rel (%p3067) target = $region56
      $region55: #{residual_forward.1} parent=51 // pred_region
        %s3070 = smul.u32 36, %s18
        %p3071 = scmp.lt.s32.totalorder %s3070, 71
        %s3072 = scalar_select %p3071, %s3070, 71
        %s3073 = smul.addr %s3072, 8
        %s3074 = scalar_lea.vmem %s6, %s3073
      $region56: #{residual_forward.1} parent=51 // pred_fallthru
        _
    $region52: #{residual_forward.1} parent=5 // pred_fallthru
      _
  $region6: #{residual_forward.1} parent=0 // loop_footer
    %s16 = sadd.s32 1, %s12
  $region7: #{residual_forward.1} parent=0 // loop_footer_branch
    %11 = sbr.rel target = $region3
  $region8: #{residual_forward.1} parent=0 // loop_exit
    _

</llo_original>
